<compile_context>
chip_gen: v7x
topology: tpu7x:2x2x1
jax: 0.10.0
libtpu: 0.0.40
codegen_flags: <defaults>
</compile_context>

<pallas_src>
import jax
import jax.numpy as jnp
from jax.experimental import pallas as pl
from jax.experimental.pallas import tpu as pltpu

VMEM_LIMIT = 32 * 1024 * 1024  # explicit scoped-VMEM cap (safe on v5e/v6e/v7x)


def _round_up(x, m):
    return pl.cdiv(x, m) * m


# ---------------------------------------------------------------------------
# Generic row-tiled fused matmul kernel:  (R, K) @ (K, C) + bias [+res] [+ReLU]
# Used for the stride != 1 fallback path (1x1 convs and im2col'd 3x3 conv).
# ---------------------------------------------------------------------------
def _matmul_kernel(relu, has_res):
    def kernel(x_ref, w_ref, b_ref, *rest):
        if has_res:
            r_ref, o_ref = rest
        else:
            (o_ref,) = rest
        acc = jnp.dot(x_ref[...], w_ref[...], preferred_element_type=jnp.float32)
        acc = acc + b_ref[...]
        if has_res:
            acc = acc + r_ref[...]
        if relu:
            acc = jnp.maximum(acc, 0.0)
        o_ref[...] = acc
    return kernel


def matmul_bias_act(x, w, b, *, relu, residual=None, tile_rows=256):
    """x, w are bf16 matmul operands; accumulation + epilogue in f32."""
    R, K = x.shape
    C = w.shape[1]
    TM = tile_rows if R >= tile_rows else max(8, _round_up(R, 8))
    Rp = _round_up(R, TM)
    if Rp != R:
        x = jnp.pad(x, ((0, Rp - R), (0, 0)))
        if residual is not None:
            residual = jnp.pad(residual, ((0, Rp - R), (0, 0)))

    in_specs = [
        pl.BlockSpec((TM, K), lambda i: (i, 0)),
        pl.BlockSpec((K, C), lambda i: (0, 0)),
        pl.BlockSpec((1, C), lambda i: (0, 0)),
    ]
    args = [x, w, b]
    if residual is not None:
        in_specs.append(pl.BlockSpec((TM, C), lambda i: (i, 0)))
        args.append(residual)

    out = pl.pallas_call(
        _matmul_kernel(relu, residual is not None),
        out_shape=jax.ShapeDtypeStruct((Rp, C), jnp.float32),
        grid=(Rp // TM,),
        in_specs=in_specs,
        out_specs=pl.BlockSpec((TM, C), lambda i: (i, 0)),
        compiler_params=pltpu.CompilerParams(
            dimension_semantics=("parallel",),
            vmem_limit_bytes=VMEM_LIMIT),
    )(*args)
    return out[:R]


# ---------------------------------------------------------------------------
# Fully fused Bottleneck (stride == 1): one pallas_call per block, grid over N.
# ---------------------------------------------------------------------------
def _bottleneck_fused_s1(x_nhwc, p):
    N, H, W, Cin = x_nhwc.shape
    HW = H * W
    P = p['w1'].shape[1]
    C3 = p['w3'].shape[1]
    has_sc = p['ws'] is not None
    x2 = x_nhwc.reshape(N, HW, Cin).astype(jnp.bfloat16)

    def kernel(x_ref, w1_ref, b1_ref, w2_ref, b2_ref, w3_ref, b3_ref, *rest):
        if has_sc:
            ws_ref, bs_ref, o_ref = rest
        else:
            (o_ref,) = rest
        x = x_ref[0]                                               # (HW, Cin) bf16
        # conv1 (1x1, BN folded) + ReLU -- single MXU dot, f32 accumulation.
        h1 = jnp.dot(x, w1_ref[...], preferred_element_type=jnp.float32)
        h1 = jnp.maximum(h1 + b1_ref[...], 0.0).astype(jnp.bfloat16)  # (HW, P)
        # conv2 (3x3, pad 1): zero-pad in VMEM, build the (HW, 9P) tap slab,
        # then ONE fused (HW, 9P) @ (9P, P) MXU dot (no HBM im2col).
        h1 = h1.reshape(H, W, P)
        zr = jnp.zeros((1, W, P), jnp.bfloat16)
        hp = jnp.concatenate([zr, h1, zr], axis=0)                 # (H+2, W, P)
        zc = jnp.zeros((H + 2, 1, P), jnp.bfloat16)
        hp = jnp.concatenate([zc, hp, zc], axis=1)                 # (H+2, W+2, P)
        taps = [hp[kh:kh + H, kw:kw + W, :] for kh in range(3) for kw in range(3)]
        slab = jnp.concatenate(taps, axis=-1).reshape(HW, 9 * P)   # (HW, 9P) bf16
        h2 = jnp.dot(slab, w2_ref[...], preferred_element_type=jnp.float32)
        h2 = jnp.maximum(h2 + b2_ref[...], 0.0).astype(jnp.bfloat16)  # (HW, P)
        # conv3 (1x1) + BN (no ReLU yet).
        h3 = jnp.dot(h2, w3_ref[...], preferred_element_type=jnp.float32) + b3_ref[...]
        # shortcut branch (projection or identity).
        if has_sc:
            sc = jnp.dot(x, ws_ref[...], preferred_element_type=jnp.float32) + bs_ref[...]
        else:
            sc = x.astype(jnp.float32)
        o_ref[0] = jnp.maximum(h3 + sc, 0.0)

    in_specs = [
        pl.BlockSpec((1, HW, Cin), lambda n: (n, 0, 0)),
        pl.BlockSpec((Cin, P), lambda n: (0, 0)),
        pl.BlockSpec((1, P), lambda n: (0, 0)),
        pl.BlockSpec((9 * P, P), lambda n: (0, 0)),
        pl.BlockSpec((1, P), lambda n: (0, 0)),
        pl.BlockSpec((P, C3), lambda n: (0, 0)),
        pl.BlockSpec((1, C3), lambda n: (0, 0)),
    ]
    args = [x2, p['w1'], p['b1'], p['w2'], p['b2'], p['w3'], p['b3']]
    if has_sc:
        in_specs += [pl.BlockSpec((Cin, C3), lambda n: (0, 0)),
                     pl.BlockSpec((1, C3), lambda n: (0, 0))]
        args += [p['ws'], p['bs']]

    out = pl.pallas_call(
        kernel,
        out_shape=jax.ShapeDtypeStruct((N, HW, C3), jnp.float32),
        grid=(N,),
        in_specs=in_specs,
        out_specs=pl.BlockSpec((1, HW, C3), lambda n: (n, 0, 0)),
        compiler_params=pltpu.CompilerParams(
            dimension_semantics=("parallel",),
            vmem_limit_bytes=VMEM_LIMIT),
    )(*args)
    return out.reshape(N, H, W, C3)


# ---------------------------------------------------------------------------
# Strided (stride != 1) fallback path.
# ---------------------------------------------------------------------------
def _bottleneck_strided(x_nhwc, p, stride):
    # TODO(synk): this path materializes the 3x3 im2col patches in HBM (K*K
    #             duplication of conv2's input); the stride==1 path builds the
    #             tap slab in VMEM instead.
    N, H, W, Cin = x_nhwc.shape
    P = p['w1'].shape[1]
    C3 = p['w3'].shape[1]
    xb = x_nhwc.astype(jnp.bfloat16)
    Ho = (H - 1) // stride + 1
    Wo = (W - 1) // stride + 1

    # Shortcut: 1x1 stride-s conv == spatial subsample + 1x1 conv.
    xs = xb[:, ::stride, ::stride, :].reshape(N * Ho * Wo, Cin)
    if p['ws'] is not None:
        sc = matmul_bias_act(xs, p['ws'], p['bs'], relu=False)
    else:
        sc = xs.astype(jnp.float32)

    # conv1 (1x1) + BN + ReLU at full resolution.
    h1 = matmul_bias_act(xb.reshape(N * H * W, Cin), p['w1'], p['b1'], relu=True)
    h1 = h1.astype(jnp.bfloat16).reshape(N, H, W, P)

    # conv2 (3x3, stride, pad 1): strided im2col in the wrapper, one fused dot.
    hp = jnp.pad(h1, ((0, 0), (1, 1), (1, 1), (0, 0)))
    taps = [hp[:, kh:kh + stride * Ho:stride, kw:kw + stride * Wo:stride, :]
            for kh in range(3) for kw in range(3)]
    patches = jnp.concatenate(taps, axis=-1).reshape(N * Ho * Wo, 9 * P)
    h2 = matmul_bias_act(patches, p['w2'], p['b2'], relu=True)

    # conv3 (1x1) + BN + residual add + final ReLU fused into one kernel.
    out = matmul_bias_act(h2.astype(jnp.bfloat16), p['w3'], p['b3'],
                          relu=True, residual=sc)
    return out.reshape(N, Ho, Wo, C3)


def bottleneck_forward(x_nchw, params):
    """PyTorch-equivalent Bottleneck.forward: NCHW in, NCHW out."""
    x = jnp.transpose(x_nchw, (0, 2, 3, 1))          # NCHW -> NHWC
    if params['stride'] == 1:
        out = _bottleneck_fused_s1(x, params)
    else:
        out = _bottleneck_strided(x, params, params['stride'])
    return jnp.transpose(out, (0, 3, 1, 2))          # NHWC -> NCHW


# ---------------------------------------------------------------------------
# Parameter construction (PyTorch-style) and BN folding for the kernels.
# ---------------------------------------------------------------------------
def make_bottleneck_params(key, in_planes, planes, stride):
    expansion = 4
    c3 = expansion * planes
    use_shortcut = stride != 1 or in_planes != c3
    ks = iter(jax.random.split(key, 32))

    def conv_w(cout, cin, k):
        fan = cin * k * k
        return jax.random.normal(next(ks), (cout, cin, k, k), jnp.float32) / jnp.sqrt(fan)

    def bn(c):
        gamma = 1.0 + 0.1 * jax.random.normal(next(ks), (c,), jnp.float32)
        beta = 0.1 * jax.random.normal(next(ks), (c,), jnp.float32)
        mean = 0.1 * jax.random.normal(next(ks), (c,), jnp.float32)
        var = 1.0 + jax.random.uniform(next(ks), (c,), jnp.float32)
        return gamma, beta, mean, var

    return {
        'stride': stride,
        'conv1_w': conv_w(planes, in_planes, 1), 'bn1': bn(planes),
        'conv2_w': conv_w(planes, planes, 3),    'bn2': bn(planes),
        'conv3_w': conv_w(c3, planes, 1),        'bn3': bn(c3),
        'short_w': conv_w(c3, in_planes, 1) if use_shortcut else None,
        'short_bn': bn(c3) if use_shortcut else None,
    }


def _fold_bn(conv_w, bn_params, eps=1e-5):
    gamma, beta, mean, var = bn_params
    scale = gamma / jnp.sqrt(var + eps)
    bias = beta - mean * scale
    return conv_w * scale[:, None, None, None], bias


def prepare_params(raw):
    """Fold eval-mode BN into the conv weights; lay weights out for the kernels."""
    w1, b1 = _fold_bn(raw['conv1_w'], raw['bn1'])
    w2, b2 = _fold_bn(raw['conv2_w'], raw['bn2'])
    w3, b3 = _fold_bn(raw['conv3_w'], raw['bn3'])
    p = {
        'stride': raw['stride'],
        'w1': jnp.transpose(w1[:, :, 0, 0]).astype(jnp.bfloat16),            # (Cin, P)
        'b1': b1.reshape(1, -1).astype(jnp.float32),
        'w2': jnp.transpose(w2, (2, 3, 1, 0)).reshape(-1, w2.shape[0]).astype(jnp.bfloat16),  # (9P, P)
        'b2': b2.reshape(1, -1).astype(jnp.float32),
        'w3': jnp.transpose(w3[:, :, 0, 0]).astype(jnp.bfloat16),            # (P, 4P)
        'b3': b3.reshape(1, -1).astype(jnp.float32),
        'ws': None, 'bs': None,
    }
    if raw['short_w'] is not None:
        ws, bs = _fold_bn(raw['short_w'], raw['short_bn'])
        p['ws'] = jnp.transpose(ws[:, :, 0, 0]).astype(jnp.bfloat16)         # (Cin, 4P)
        p['bs'] = bs.reshape(1, -1).astype(jnp.float32)
    return p


# ---------------------------------------------------------------------------
# Pure-JAX reference (lax.conv, f32, eval-mode BN) for verification.
# ---------------------------------------------------------------------------
def ref_bottleneck(x_nchw, raw, eps=1e-5):
    x = jnp.transpose(x_nchw, (0, 2, 3, 1))

    def conv(h, w, stride, pad):
        return jax.lax.conv_general_dilated(
            h, jnp.transpose(w, (2, 3, 1, 0)), (stride, stride),
            [(pad, pad), (pad, pad)],
            dimension_numbers=('NHWC', 'HWIO', 'NHWC'),
            precision=jax.lax.Precision.HIGHEST)

    def bn(h, bn_params):
        gamma, beta, mean, var = bn_params
        return (h - mean) * (gamma / jnp.sqrt(var + eps)) + beta

    s = raw['stride']
    out = jax.nn.relu(bn(conv(x, raw['conv1_w'], 1, 0), raw['bn1']))
    out = jax.nn.relu(bn(conv(out, raw['conv2_w'], s, 1), raw['bn2']))
    out = bn(conv(out, raw['conv3_w'], 1, 0), raw['bn3'])
    if raw['short_w'] is not None:
        sc = bn(conv(x, raw['short_w'], s, 0), raw['short_bn'])
    else:
        sc = x
    return jnp.transpose(jax.nn.relu(out + sc), (0, 3, 1, 2))


if __name__ == "__main__":
    key = jax.random.PRNGKey(0)
    # (in_planes, planes, stride): projection shortcut / identity shortcut / strided
    configs = [(4, 4, 1), (16, 4, 1), (8, 4, 2)]
    N, H, W = 2, 16, 16
    for idx, (in_planes, planes, stride) in enumerate(configs):
        kx, kp = jax.random.split(jax.random.fold_in(key, idx))
        x = jax.random.normal(kx, (N, in_planes, H, W), jnp.float32)
        raw = make_bottleneck_params(kp, in_planes, planes, stride)
        params = prepare_params(raw)

        out = jax.block_until_ready(bottleneck_forward(x, params))
        ref = ref_bottleneck(x, raw)
        assert out.shape == ref.shape, (out.shape, ref.shape)
        assert jnp.allclose(out, ref, rtol=3e-2, atol=3e-2), (
            "config %d max|diff|=%g" % (idx, float(jnp.max(jnp.abs(out - ref)))))
    print("KERNEL_OK")
</pallas_src>

<mosaic_0001>
module attributes {stable_mosaic.version = 11 : i64} {
  func.func @kernel(%arg0: i32, %arg1: memref<1x256x4xbf16, #tpu.memory_space<vmem>>, %arg2: memref<4x4xbf16, #tpu.memory_space<vmem>>, %arg3: memref<1x4xf32, #tpu.memory_space<vmem>>, %arg4: memref<36x4xbf16, #tpu.memory_space<vmem>>, %arg5: memref<1x4xf32, #tpu.memory_space<vmem>>, %arg6: memref<4x16xbf16, #tpu.memory_space<vmem>>, %arg7: memref<1x16xf32, #tpu.memory_space<vmem>>, %arg8: memref<4x16xbf16, #tpu.memory_space<vmem>>, %arg9: memref<1x16xf32, #tpu.memory_space<vmem>>, %arg10: memref<1x256x16xf32, #tpu.memory_space<vmem>>) attributes {dimension_semantics = [#tpu.dimension_semantics<parallel>], iteration_bounds = array<i64: 2>, scalar_prefetch = 0 : i64, scratch_operands = 0 : i64, tpu.core_type = #tpu.core_type<tc>, window_params = [{transform_indices = @transform_0, window_bounds = array<i64: 1, 256, 4>}, {pipeline_mode = #tpu.pipeline_mode<synchronous>, transform_indices = @transform_1, window_bounds = array<i64: 4, 4>}, {pipeline_mode = #tpu.pipeline_mode<synchronous>, transform_indices = @transform_2, window_bounds = array<i64: 1, 4>}, {pipeline_mode = #tpu.pipeline_mode<synchronous>, transform_indices = @transform_3, window_bounds = array<i64: 36, 4>}, {pipeline_mode = #tpu.pipeline_mode<synchronous>, transform_indices = @transform_4, window_bounds = array<i64: 1, 4>}, {pipeline_mode = #tpu.pipeline_mode<synchronous>, transform_indices = @transform_5, window_bounds = array<i64: 4, 16>}, {pipeline_mode = #tpu.pipeline_mode<synchronous>, transform_indices = @transform_6, window_bounds = array<i64: 1, 16>}, {pipeline_mode = #tpu.pipeline_mode<synchronous>, transform_indices = @transform_7, window_bounds = array<i64: 4, 16>}, {pipeline_mode = #tpu.pipeline_mode<synchronous>, transform_indices = @transform_8, window_bounds = array<i64: 1, 16>}, {transform_indices = @transform_9, window_bounds = array<i64: 1, 256, 16>}]} {
    %c0 = arith.constant 0 : index
    %c0_0 = arith.constant 0 : index
    %c0_1 = arith.constant 0 : index
    %0 = vector.load %arg1[%c0, %c0_0, %c0_1] : memref<1x256x4xbf16, #tpu.memory_space<vmem>>, vector<1x256x4xbf16>
    %1 = vector.shape_cast %0 : vector<1x256x4xbf16> to vector<256x4xbf16>
    %c0_2 = arith.constant 0 : index
    %c0_3 = arith.constant 0 : index
    %2 = vector.load %arg2[%c0_2, %c0_3] : memref<4x4xbf16, #tpu.memory_space<vmem>>, vector<4x4xbf16>
    %cst = arith.constant dense<0.000000e+00> : vector<256x4xf32>
    %3 = tpu.matmul %1, %2, %cst {dimension_numbers = #tpu.dot_dimension_numbers<[1], [0], [0], [1], [0, 0, 1, 1], [], []>} : vector<256x4xbf16>, vector<4x4xbf16>, vector<256x4xf32> -> vector<256x4xf32>
    %c0_4 = arith.constant 0 : index
    %c0_5 = arith.constant 0 : index
    %4 = vector.load %arg3[%c0_4, %c0_5] : memref<1x4xf32, #tpu.memory_space<vmem>>, vector<1x4xf32>
    %5 = vector.broadcast %4 : vector<1x4xf32> to vector<256x4xf32>
    %6 = arith.addf %3, %5 : vector<256x4xf32>
    %cst_6 = arith.constant 0.000000e+00 : f32
    %7 = vector.broadcast %cst_6 : f32 to vector<256x4xf32>
    %8 = arith.maximumf %6, %7 : vector<256x4xf32>
    %9 = arith.truncf %8 : vector<256x4xf32> to vector<256x4xbf16>
    %10 = vector.shape_cast %9 : vector<256x4xbf16> to vector<16x16x4xbf16>
    %cst_7 = arith.constant 0.000000e+00 : bf16
    %11 = vector.broadcast %cst_7 : bf16 to vector<1x16x4xbf16>
    %12 = tpu.concatenate %11, %10, %11 in 0 : vector<1x16x4xbf16>, vector<16x16x4xbf16>, vector<1x16x4xbf16> -> vector<18x16x4xbf16>
    %cst_8 = arith.constant 0.000000e+00 : bf16
    %13 = vector.broadcast %cst_8 : bf16 to vector<18x1x4xbf16>
    %14 = tpu.concatenate %13, %12, %13 in 1 : vector<18x1x4xbf16>, vector<18x16x4xbf16>, vector<18x1x4xbf16> -> vector<18x18x4xbf16>
    %15 = vector.extract_strided_slice %14 {offsets = [0, 0, 0], sizes = [16, 16, 4], strides = [1, 1, 1]} : vector<18x18x4xbf16> to vector<16x16x4xbf16>
    %16 = vector.extract_strided_slice %14 {offsets = [0, 1, 0], sizes = [16, 16, 4], strides = [1, 1, 1]} : vector<18x18x4xbf16> to vector<16x16x4xbf16>
    %17 = vector.extract_strided_slice %14 {offsets = [0, 2, 0], sizes = [16, 16, 4], strides = [1, 1, 1]} : vector<18x18x4xbf16> to vector<16x16x4xbf16>
    %18 = vector.extract_strided_slice %14 {offsets = [1, 0, 0], sizes = [16, 16, 4], strides = [1, 1, 1]} : vector<18x18x4xbf16> to vector<16x16x4xbf16>
    %19 = vector.extract_strided_slice %14 {offsets = [1, 1, 0], sizes = [16, 16, 4], strides = [1, 1, 1]} : vector<18x18x4xbf16> to vector<16x16x4xbf16>
    %20 = vector.extract_strided_slice %14 {offsets = [1, 2, 0], sizes = [16, 16, 4], strides = [1, 1, 1]} : vector<18x18x4xbf16> to vector<16x16x4xbf16>
    %21 = vector.extract_strided_slice %14 {offsets = [2, 0, 0], sizes = [16, 16, 4], strides = [1, 1, 1]} : vector<18x18x4xbf16> to vector<16x16x4xbf16>
    %22 = vector.extract_strided_slice %14 {offsets = [2, 1, 0], sizes = [16, 16, 4], strides = [1, 1, 1]} : vector<18x18x4xbf16> to vector<16x16x4xbf16>
    %23 = vector.extract_strided_slice %14 {offsets = [2, 2, 0], sizes = [16, 16, 4], strides = [1, 1, 1]} : vector<18x18x4xbf16> to vector<16x16x4xbf16>
    %24 = tpu.concatenate %15, %16, %17, %18, %19, %20, %21, %22, %23 in 2 : vector<16x16x4xbf16>, vector<16x16x4xbf16>, vector<16x16x4xbf16>, vector<16x16x4xbf16>, vector<16x16x4xbf16>, vector<16x16x4xbf16>, vector<16x16x4xbf16>, vector<16x16x4xbf16>, vector<16x16x4xbf16> -> vector<16x16x36xbf16>
    %25 = vector.shape_cast %24 : vector<16x16x36xbf16> to vector<256x36xbf16>
    %c0_9 = arith.constant 0 : index
    %c0_10 = arith.constant 0 : index
    %26 = vector.load %arg4[%c0_9, %c0_10] : memref<36x4xbf16, #tpu.memory_space<vmem>>, vector<36x4xbf16>
    %cst_11 = arith.constant dense<0.000000e+00> : vector<256x4xf32>
    %27 = tpu.matmul %25, %26, %cst_11 {dimension_numbers = #tpu.dot_dimension_numbers<[1], [0], [0], [1], [0, 0, 1, 1], [], []>} : vector<256x36xbf16>, vector<36x4xbf16>, vector<256x4xf32> -> vector<256x4xf32>
    %c0_12 = arith.constant 0 : index
    %c0_13 = arith.constant 0 : index
    %28 = vector.load %arg5[%c0_12, %c0_13] : memref<1x4xf32, #tpu.memory_space<vmem>>, vector<1x4xf32>
    %29 = vector.broadcast %28 : vector<1x4xf32> to vector<256x4xf32>
    %30 = arith.addf %27, %29 : vector<256x4xf32>
    %cst_14 = arith.constant 0.000000e+00 : f32
    %31 = vector.broadcast %cst_14 : f32 to vector<256x4xf32>
    %32 = arith.maximumf %30, %31 : vector<256x4xf32>
    %33 = arith.truncf %32 : vector<256x4xf32> to vector<256x4xbf16>
    %c0_15 = arith.constant 0 : index
    %c0_16 = arith.constant 0 : index
    %34 = vector.load %arg6[%c0_15, %c0_16] : memref<4x16xbf16, #tpu.memory_space<vmem>>, vector<4x16xbf16>
    %cst_17 = arith.constant dense<0.000000e+00> : vector<256x16xf32>
    %35 = tpu.matmul %33, %34, %cst_17 {dimension_numbers = #tpu.dot_dimension_numbers<[1], [0], [0], [1], [0, 0, 1, 1], [], []>} : vector<256x4xbf16>, vector<4x16xbf16>, vector<256x16xf32> -> vector<256x16xf32>
    %c0_18 = arith.constant 0 : index
    %c0_19 = arith.constant 0 : index
    %36 = vector.load %arg7[%c0_18, %c0_19] : memref<1x16xf32, #tpu.memory_space<vmem>>, vector<1x16xf32>
    %37 = vector.broadcast %36 : vector<1x16xf32> to vector<256x16xf32>
    %38 = arith.addf %35, %37 : vector<256x16xf32>
    %c0_20 = arith.constant 0 : index
    %c0_21 = arith.constant 0 : index
    %39 = vector.load %arg8[%c0_20, %c0_21] : memref<4x16xbf16, #tpu.memory_space<vmem>>, vector<4x16xbf16>
    %cst_22 = arith.constant dense<0.000000e+00> : vector<256x16xf32>
    %40 = tpu.matmul %1, %39, %cst_22 {dimension_numbers = #tpu.dot_dimension_numbers<[1], [0], [0], [1], [0, 0, 1, 1], [], []>} : vector<256x4xbf16>, vector<4x16xbf16>, vector<256x16xf32> -> vector<256x16xf32>
    %c0_23 = arith.constant 0 : index
    %c0_24 = arith.constant 0 : index
    %41 = vector.load %arg9[%c0_23, %c0_24] : memref<1x16xf32, #tpu.memory_space<vmem>>, vector<1x16xf32>
    %42 = vector.broadcast %41 : vector<1x16xf32> to vector<256x16xf32>
    %43 = arith.addf %40, %42 : vector<256x16xf32>
    %44 = arith.addf %38, %43 : vector<256x16xf32>
    %cst_25 = arith.constant 0.000000e+00 : f32
    %45 = vector.broadcast %cst_25 : f32 to vector<256x16xf32>
    %46 = arith.maximumf %44, %45 : vector<256x16xf32>
    %c0_26 = arith.constant 0 : index
    %c0_27 = arith.constant 0 : index
    %c0_28 = arith.constant 0 : index
    %47 = vector.load %arg10[%c0_26, %c0_27, %c0_28] : memref<1x256x16xf32, #tpu.memory_space<vmem>>, vector<1x256x16xf32>
    %48 = vector.shape_cast %47 : vector<1x256x16xf32> to vector<256x16xf32>
    %49 = vector.shape_cast %46 : vector<256x16xf32> to vector<1x256x16xf32>
    tpu.vector_store %arg10[%c0_26, %c0_27, %c0_28], %49 {strides = array<i32>} : memref<1x256x16xf32, #tpu.memory_space<vmem>>, vector<1x256x16xf32>,
    return
  }
  func.func @transform_0(%arg0: i32) -> (i32, i32, i32) {
    %c0_i32 = arith.constant 0 : i32
    %c0_i32_0 = arith.constant 0 : i32
    %c0_i32_1 = arith.constant 0 : i32
    return %arg0, %c0_i32, %c0_i32_0 : i32, i32, i32
  }
  func.func @transform_1(%arg0: i32) -> (i32, i32) {
    %c0_i32 = arith.constant 0 : i32
    %c0_i32_0 = arith.constant 0 : i32
    %c0_i32_1 = arith.constant 0 : i32
    return %c0_i32, %c0_i32_0 : i32, i32
  }
  func.func @transform_2(%arg0: i32) -> (i32, i32) {
    %c0_i32 = arith.constant 0 : i32
    %c0_i32_0 = arith.constant 0 : i32
    %c0_i32_1 = arith.constant 0 : i32
    return %c0_i32, %c0_i32_0 : i32, i32
  }
  func.func @transform_3(%arg0: i32) -> (i32, i32) {
    %c0_i32 = arith.constant 0 : i32
    %c0_i32_0 = arith.constant 0 : i32
    %c0_i32_1 = arith.constant 0 : i32
    return %c0_i32, %c0_i32_0 : i32, i32
  }
  func.func @transform_4(%arg0: i32) -> (i32, i32) {
    %c0_i32 = arith.constant 0 : i32
    %c0_i32_0 = arith.constant 0 : i32
    %c0_i32_1 = arith.constant 0 : i32
    return %c0_i32, %c0_i32_0 : i32, i32
  }
  func.func @transform_5(%arg0: i32) -> (i32, i32) {
    %c0_i32 = arith.constant 0 : i32
    %c0_i32_0 = arith.constant 0 : i32
    %c0_i32_1 = arith.constant 0 : i32
    return %c0_i32, %c0_i32_0 : i32, i32
  }
  func.func @transform_6(%arg0: i32) -> (i32, i32) {
    %c0_i32 = arith.constant 0 : i32
    %c0_i32_0 = arith.constant 0 : i32
    %c0_i32_1 = arith.constant 0 : i32
    return %c0_i32, %c0_i32_0 : i32, i32
  }
  func.func @transform_7(%arg0: i32) -> (i32, i32) {
    %c0_i32 = arith.constant 0 : i32
    %c0_i32_0 = arith.constant 0 : i32
    %c0_i32_1 = arith.constant 0 : i32
    return %c0_i32, %c0_i32_0 : i32, i32
  }
  func.func @transform_8(%arg0: i32) -> (i32, i32) {
    %c0_i32 = arith.constant 0 : i32
    %c0_i32_0 = arith.constant 0 : i32
    %c0_i32_1 = arith.constant 0 : i32
    return %c0_i32, %c0_i32_0 : i32, i32
  }
  func.func @transform_9(%arg0: i32) -> (i32, i32, i32) {
    %c0_i32 = arith.constant 0 : i32
    %c0_i32_0 = arith.constant 0 : i32
    %c0_i32_1 = arith.constant 0 : i32
    return %arg0, %c0_i32, %c0_i32_0 : i32, i32, i32
  }
}

</mosaic_0001>

<llo_original>
// kernel: tpu_custom_call.1
$region0: #{tpu_custom_call.1}
  #allocation0 [shape = 'u32[]', space=smem, size = 0x4, offset = 0x4, fixed_abs, tag = 'smem constant byte address 0x4 - core index']
  #allocation1 [shape = 'u32[144,128]{1,0:T(1,128)}', space=vmem, size = 0x12000, scoped, tag = 'internal scratch']
  %s0 = inlined_call_operand.vmem [shape: bf16[2,256,4], index: 0, kind: input, shape index: {}]
  %s1 = inlined_call_operand.vmem [shape: bf16[4,4], index: 1, kind: input, shape index: {}]
  %s2 = inlined_call_operand.vmem [shape: f32[1,4], index: 2, kind: input, shape index: {}]
  %s3 = inlined_call_operand.vmem [shape: bf16[36,4], index: 3, kind: input, shape index: {}]
  %s4 = inlined_call_operand.vmem [shape: f32[1,4], index: 4, kind: input, shape index: {}]
  %s5 = inlined_call_operand.vmem [shape: bf16[4,16], index: 5, kind: input, shape index: {}]
  %s6 = inlined_call_operand.vmem [shape: f32[1,16], index: 6, kind: input, shape index: {}]
  %s7 = inlined_call_operand.vmem [shape: bf16[4,16], index: 7, kind: input, shape index: {}]
  %s8 = inlined_call_operand.vmem [shape: f32[1,16], index: 8, kind: input, shape index: {}]
  %s9 = inlined_call_operand.vmem [shape: f32[2,256,16], index: 9, kind: output, shape index: {}]
  %s10 = sld [smem:[#allocation0]]
  $region69: #{tpu_custom_call.1} parent=0
    _
  %s12 = ssub.s32 1, %s10
  %s13 = scalar_select 0, %s12, %s10
  loop: start=0, step=1, limit=4
  $region2: #{tpu_custom_call.1} parent=0 // loop_pre_header
    _
  $region3: #{tpu_custom_call.1} parent=0 // loop_header
    %s15 = sphi 0, %s19
    %p16 = scmp.ge.s32.totalorder %s15, 4
    %s25 = sphi 0, %s27
    %s28 = sphi 0, %s25
    %s29 = sphi 0, %s28
    %s45 = sphi 0, %s29
    %s49 = sphi 0, %s49
    %s51 = sphi 0, %s49
    %s52 = sphi 0, %s51
    %s66 = sphi 0, %s52
    %s70 = sphi 0, %s70
    %s72 = sphi 0, %s70
    %s73 = sphi 0, %s72
    %s87 = sphi 0, %s73
    %s91 = sphi 0, %s91
    %s93 = sphi 0, %s91
    %s94 = sphi 0, %s93
    %s108 = sphi 0, %s94
    %s112 = sphi 0, %s112
    %s114 = sphi 0, %s112
    %s115 = sphi 0, %s114
    %s129 = sphi 0, %s115
    %s133 = sphi 0, %s133
    %s135 = sphi 0, %s133
    %s136 = sphi 0, %s135
    %s150 = sphi 0, %s136
    %s154 = sphi 0, %s154
    %s156 = sphi 0, %s154
    %s157 = sphi 0, %s156
    %s171 = sphi 0, %s157
    %s175 = sphi 0, %s175
    %s177 = sphi 0, %s175
    %s178 = sphi 0, %s177
    %s192 = sphi 0, %s178
    %s196 = sphi 0, %s196
    %s198 = sphi 0, %s196
    %s199 = sphi 0, %s198
    %s213 = sphi 0, %s199
    %s219 = sphi 0, %s221
    %s222 = sphi 0, %s219
    %s223 = sphi 0, %s222
    %s239 = sphi 0, %s223
  $region4: #{tpu_custom_call.1} parent=0 // loop_header_branch
    %18 = sbr.rel (%p16) target = $region8
  $region5: #{tpu_custom_call.1} parent=0 // loop_body
    %s20 = ssub.s32 %s15, 1
    %s21 = ssub.s32 %s15, 2
    %s22 = sadd.s32 %s15, 1
    %s23 = ssub.s32 %s15, %s22
    %p24 = scmp.eq.s32.totalorder %s23, 0
    %s26 = sadd.s32 %s25, 1
    %s27 = scalar_select %p24, %s25, %s26
    %p30 = pneg %p24
    %p31 = scmp.eq.s32.totalorder %s15, 1
    %p32 = por %p30, %p31
    %p33 = scmp.ne.s32.totalorder %s25, %s28
    %p34 = scmp.eq.s32.totalorder %s15, 0
    %p35 = por %p33, %p34
    %p36 = scmp.ne.s32.totalorder %s25, %s28
    %p37 = scmp.eq.s32.totalorder %s20, 1
    %p38 = por %p36, %p37
    %p39 = scmp.ne.s32.totalorder %s28, %s29
    %p40 = scmp.eq.s32.totalorder %s20, 0
    %p41 = por %p39, %p40
    %p42 = scmp.ne.s32.totalorder %s28, %s29
    %p43 = scmp.eq.s32.totalorder %s21, 1
    %p44 = por %p42, %p43
    %p46 = scmp.ne.s32.totalorder %s29, %s45
    %p47 = scmp.eq.s32.totalorder %s21, 0
    %p48 = por %p46, %p47
    %s50 = sadd.s32 %s49, 1
    %p53 = scmp.eq.s32.totalorder %s15, 1
    %p54 = scmp.ne.s32.totalorder %s49, %s51
    %p55 = scmp.eq.s32.totalorder %s15, 0
    %p56 = por %p54, %p55
    %p57 = scmp.ne.s32.totalorder %s49, %s51
    %p58 = scmp.eq.s32.totalorder %s20, 1
    %p59 = por %p57, %p58
    %p60 = scmp.ne.s32.totalorder %s51, %s52
    %p61 = scmp.eq.s32.totalorder %s20, 0
    %p62 = por %p60, %p61
    %p63 = scmp.ne.s32.totalorder %s51, %s52
    %p64 = scmp.eq.s32.totalorder %s21, 1
    %p65 = por %p63, %p64
    %p67 = scmp.ne.s32.totalorder %s52, %s66
    %p68 = scmp.eq.s32.totalorder %s21, 0
    %p69 = por %p67, %p68
    %s71 = sadd.s32 %s70, 1
    %p74 = scmp.eq.s32.totalorder %s15, 1
    %p75 = scmp.ne.s32.totalorder %s70, %s72
    %p76 = scmp.eq.s32.totalorder %s15, 0
    %p77 = por %p75, %p76
    %p78 = scmp.ne.s32.totalorder %s70, %s72
    %p79 = scmp.eq.s32.totalorder %s20, 1
    %p80 = por %p78, %p79
    %p81 = scmp.ne.s32.totalorder %s72, %s73
    %p82 = scmp.eq.s32.totalorder %s20, 0
    %p83 = por %p81, %p82
    %p84 = scmp.ne.s32.totalorder %s72, %s73
    %p85 = scmp.eq.s32.totalorder %s21, 1
    %p86 = por %p84, %p85
    %p88 = scmp.ne.s32.totalorder %s73, %s87
    %p89 = scmp.eq.s32.totalorder %s21, 0
    %p90 = por %p88, %p89
    %s92 = sadd.s32 %s91, 1
    %p95 = scmp.eq.s32.totalorder %s15, 1
    %p96 = scmp.ne.s32.totalorder %s91, %s93
    %p97 = scmp.eq.s32.totalorder %s15, 0
    %p98 = por %p96, %p97
    %p99 = scmp.ne.s32.totalorder %s91, %s93
    %p100 = scmp.eq.s32.totalorder %s20, 1
    %p101 = por %p99, %p100
    %p102 = scmp.ne.s32.totalorder %s93, %s94
    %p103 = scmp.eq.s32.totalorder %s20, 0
    %p104 = por %p102, %p103
    %p105 = scmp.ne.s32.totalorder %s93, %s94
    %p106 = scmp.eq.s32.totalorder %s21, 1
    %p107 = por %p105, %p106
    %p109 = scmp.ne.s32.totalorder %s94, %s108
    %p110 = scmp.eq.s32.totalorder %s21, 0
    %p111 = por %p109, %p110
    %s113 = sadd.s32 %s112, 1
    %p116 = scmp.eq.s32.totalorder %s15, 1
    %p117 = scmp.ne.s32.totalorder %s112, %s114
    %p118 = scmp.eq.s32.totalorder %s15, 0
    %p119 = por %p117, %p118
    %p120 = scmp.ne.s32.totalorder %s112, %s114
    %p121 = scmp.eq.s32.totalorder %s20, 1
    %p122 = por %p120, %p121
    %p123 = scmp.ne.s32.totalorder %s114, %s115
    %p124 = scmp.eq.s32.totalorder %s20, 0
    %p125 = por %p123, %p124
    %p126 = scmp.ne.s32.totalorder %s114, %s115
    %p127 = scmp.eq.s32.totalorder %s21, 1
    %p128 = por %p126, %p127
    %p130 = scmp.ne.s32.totalorder %s115, %s129
    %p131 = scmp.eq.s32.totalorder %s21, 0
    %p132 = por %p130, %p131
    %s134 = sadd.s32 %s133, 1
    %p137 = scmp.eq.s32.totalorder %s15, 1
    %p138 = scmp.ne.s32.totalorder %s133, %s135
    %p139 = scmp.eq.s32.totalorder %s15, 0
    %p140 = por %p138, %p139
    %p141 = scmp.ne.s32.totalorder %s133, %s135
    %p142 = scmp.eq.s32.totalorder %s20, 1
    %p143 = por %p141, %p142
    %p144 = scmp.ne.s32.totalorder %s135, %s136
    %p145 = scmp.eq.s32.totalorder %s20, 0
    %p146 = por %p144, %p145
    %p147 = scmp.ne.s32.totalorder %s135, %s136
    %p148 = scmp.eq.s32.totalorder %s21, 1
    %p149 = por %p147, %p148
    %p151 = scmp.ne.s32.totalorder %s136, %s150
    %p152 = scmp.eq.s32.totalorder %s21, 0
    %p153 = por %p151, %p152
    %s155 = sadd.s32 %s154, 1
    %p158 = scmp.eq.s32.totalorder %s15, 1
    %p159 = scmp.ne.s32.totalorder %s154, %s156
    %p160 = scmp.eq.s32.totalorder %s15, 0
    %p161 = por %p159, %p160
    %p162 = scmp.ne.s32.totalorder %s154, %s156
    %p163 = scmp.eq.s32.totalorder %s20, 1
    %p164 = por %p162, %p163
    %p165 = scmp.ne.s32.totalorder %s156, %s157
    %p166 = scmp.eq.s32.totalorder %s20, 0
    %p167 = por %p165, %p166
    %p168 = scmp.ne.s32.totalorder %s156, %s157
    %p169 = scmp.eq.s32.totalorder %s21, 1
    %p170 = por %p168, %p169
    %p172 = scmp.ne.s32.totalorder %s157, %s171
    %p173 = scmp.eq.s32.totalorder %s21, 0
    %p174 = por %p172, %p173
    %s176 = sadd.s32 %s175, 1
    %p179 = scmp.eq.s32.totalorder %s15, 1
    %p180 = scmp.ne.s32.totalorder %s175, %s177
    %p181 = scmp.eq.s32.totalorder %s15, 0
    %p182 = por %p180, %p181
    %p183 = scmp.ne.s32.totalorder %s175, %s177
    %p184 = scmp.eq.s32.totalorder %s20, 1
    %p185 = por %p183, %p184
    %p186 = scmp.ne.s32.totalorder %s177, %s178
    %p187 = scmp.eq.s32.totalorder %s20, 0
    %p188 = por %p186, %p187
    %p189 = scmp.ne.s32.totalorder %s177, %s178
    %p190 = scmp.eq.s32.totalorder %s21, 1
    %p191 = por %p189, %p190
    %p193 = scmp.ne.s32.totalorder %s178, %s192
    %p194 = scmp.eq.s32.totalorder %s21, 0
    %p195 = por %p193, %p194
    %s197 = sadd.s32 %s196, 1
    %p200 = scmp.eq.s32.totalorder %s15, 1
    %p201 = scmp.ne.s32.totalorder %s196, %s198
    %p202 = scmp.eq.s32.totalorder %s15, 0
    %p203 = por %p201, %p202
    %p204 = scmp.ne.s32.totalorder %s196, %s198
    %p205 = scmp.eq.s32.totalorder %s20, 1
    %p206 = por %p204, %p205
    %p207 = scmp.ne.s32.totalorder %s198, %s199
    %p208 = scmp.eq.s32.totalorder %s20, 0
    %p209 = por %p207, %p208
    %p210 = scmp.ne.s32.totalorder %s198, %s199
    %p211 = scmp.eq.s32.totalorder %s21, 1
    %p212 = por %p210, %p211
    %p214 = scmp.ne.s32.totalorder %s199, %s213
    %p215 = scmp.eq.s32.totalorder %s21, 0
    %p216 = por %p214, %p215
    %s217 = ssub.s32 %s15, %s22
    %p218 = scmp.eq.s32.totalorder %s217, 0
    %s220 = sadd.s32 %s219, 1
    %s221 = scalar_select %p218, %s219, %s220
    %p224 = pneg %p218
    %p225 = scmp.eq.s32.totalorder %s15, 1
    %p226 = por %p224, %p225
    %p227 = scmp.ne.s32.totalorder %s219, %s222
    %p228 = scmp.eq.s32.totalorder %s15, 0
    %p229 = por %p227, %p228
    %p230 = scmp.ne.s32.totalorder %s219, %s222
    %p231 = scmp.eq.s32.totalorder %s20, 1
    %p232 = por %p230, %p231
    %p233 = scmp.ne.s32.totalorder %s222, %s223
    %p234 = scmp.eq.s32.totalorder %s20, 0
    %p235 = por %p233, %p234
    %p236 = scmp.ne.s32.totalorder %s222, %s223
    %p237 = scmp.eq.s32.totalorder %s21, 1
    %p238 = por %p236, %p237
    %p240 = scmp.ne.s32.totalorder %s223, %s239
    %p241 = scmp.eq.s32.totalorder %s21, 0
    %p242 = por %p240, %p241
    %p243 = scmp.le.s32.totalorder 1, %s15
    %p244 = scmp.lt.s32.totalorder %s15, 3
    %p245 = pnand %p243, %p244
    %p246 = pneg %p245
    // Predicated region
    $region9: #{tpu_custom_call.1} parent=5 // pred_check
      _
    $region10: #{tpu_custom_call.1} parent=5 // pred_check_branch
      %248 = sbr.rel (%p245) target = $region12
    $region11: #{tpu_custom_call.1} parent=5 // pred_region
      %s249 = ssub.s32 %s15, 1
      // Predicated region
      $region13: #{tpu_custom_call.1} parent=11 // pred_check
        %p250 = pneg %p62
      $region14: #{tpu_custom_call.1} parent=11 // pred_check_branch
        %252 = sbr.rel (%p250) target = $region16
      $region15: #{tpu_custom_call.1} parent=11 // pred_region
        _
      $region16: #{tpu_custom_call.1} parent=11 // pred_fallthru
        _
      // Predicated region
      $region17: #{tpu_custom_call.1} parent=11 // pred_check
        %p253 = pneg %p83
      $region18: #{tpu_custom_call.1} parent=11 // pred_check_branch
        %255 = sbr.rel (%p253) target = $region20
      $region19: #{tpu_custom_call.1} parent=11 // pred_region
        _
      $region20: #{tpu_custom_call.1} parent=11 // pred_fallthru
        _
      // Predicated region
      $region21: #{tpu_custom_call.1} parent=11 // pred_check
        %p256 = pneg %p104
      $region22: #{tpu_custom_call.1} parent=11 // pred_check_branch
        %258 = sbr.rel (%p256) target = $region24
      $region23: #{tpu_custom_call.1} parent=11 // pred_region
        _
      $region24: #{tpu_custom_call.1} parent=11 // pred_fallthru
        _
      // Predicated region
      $region25: #{tpu_custom_call.1} parent=11 // pred_check
        %p259 = pneg %p125
      $region26: #{tpu_custom_call.1} parent=11 // pred_check_branch
        %261 = sbr.rel (%p259) target = $region28
      $region27: #{tpu_custom_call.1} parent=11 // pred_region
        _
      $region28: #{tpu_custom_call.1} parent=11 // pred_fallthru
        _
      // Predicated region
      $region29: #{tpu_custom_call.1} parent=11 // pred_check
        %p262 = pneg %p146
      $region30: #{tpu_custom_call.1} parent=11 // pred_check_branch
        %264 = sbr.rel (%p262) target = $region32
      $region31: #{tpu_custom_call.1} parent=11 // pred_region
        _
      $region32: #{tpu_custom_call.1} parent=11 // pred_fallthru
        _
      // Predicated region
      $region33: #{tpu_custom_call.1} parent=11 // pred_check
        %p265 = pneg %p167
      $region34: #{tpu_custom_call.1} parent=11 // pred_check_branch
        %267 = sbr.rel (%p265) target = $region36
      $region35: #{tpu_custom_call.1} parent=11 // pred_region
        _
      $region36: #{tpu_custom_call.1} parent=11 // pred_fallthru
        _
      // Predicated region
      $region37: #{tpu_custom_call.1} parent=11 // pred_check
        %p268 = pneg %p188
      $region38: #{tpu_custom_call.1} parent=11 // pred_check_branch
        %270 = sbr.rel (%p268) target = $region40
      $region39: #{tpu_custom_call.1} parent=11 // pred_region
        _
      $region40: #{tpu_custom_call.1} parent=11 // pred_fallthru
        _
      // Predicated region
      $region41: #{tpu_custom_call.1} parent=11 // pred_check
        %p271 = pneg %p209
      $region42: #{tpu_custom_call.1} parent=11 // pred_check_branch
        %273 = sbr.rel (%p271) target = $region44
      $region43: #{tpu_custom_call.1} parent=11 // pred_region
        _
      $region44: #{tpu_custom_call.1} parent=11 // pred_fallthru
        _
    $region12: #{tpu_custom_call.1} parent=5 // pred_fallthru
      _
    %p274 = scmp.lt.s32.totalorder %s15, 2
    // Predicated region
    $region45: #{tpu_custom_call.1} parent=5 // pred_check
      %p275 = pneg %p274
    $region46: #{tpu_custom_call.1} parent=5 // pred_check_branch
      %277 = sbr.rel (%p275) target = $region48
    $region47: #{tpu_custom_call.1} parent=5 // pred_region
      // Predicated region
      $region49: #{tpu_custom_call.1} parent=47 // pred_check
        %p278 = pneg %p35
      $region50: #{tpu_custom_call.1} parent=47 // pred_check_branch
        %280 = sbr.rel (%p278) target = $region52
      $region51: #{tpu_custom_call.1} parent=47 // pred_region
        %p281 = scmp.lt.s32.totalorder %s15, 1
        %s282 = scalar_select %p281, %s15, 1
        %s283 = smul.addr %s282, 32
        %s284 = smul.addr %s283, 4
        %s285 = scalar_lea.vmem %s0, %s284
      $region52: #{tpu_custom_call.1} parent=47 // pred_fallthru
        _
    $region48: #{tpu_custom_call.1} parent=5 // pred_fallthru
      _
    %p286 = scmp.le.s32.totalorder 1, %s15
    %p287 = scmp.lt.s32.totalorder %s15, 3
    %p288 = pnand %p286, %p287
    %p289 = pneg %p288
    // Predicated region
    $region53: #{tpu_custom_call.1} parent=5 // pred_check
      _
    $region54: #{tpu_custom_call.1} parent=5 // pred_check_branch
      %291 = sbr.rel (%p288) target = $region56
    $region55: #{tpu_custom_call.1} parent=5 // pred_region
      %s292 = ssub.s32 %s15, 1
      %p293 = scmp.lt.s32.totalorder %s20, 1
      %s294 = scalar_select %p293, %s20, 1
      %s295 = smul.addr %s294, 32
      %s296 = smul.addr %s295, 4
      %s297 = scalar_lea.vmem %s0, %s296
      %p298 = pneg %p41
      %p299 = pneg %p38
      %p300 = pneg %p62
      %p301 = pneg %p59
      %p302 = pneg %p83
      %p303 = pneg %p80
      %p304 = pneg %p104
      %p305 = pneg %p101
      %p306 = pneg %p125
      %p307 = pneg %p122
      %p308 = pneg %p146
      %p309 = pneg %p143
      %p310 = pneg %p167
      %p311 = pneg %p164
      %p312 = pneg %p188
      %p313 = pneg %p185
      %p314 = pneg %p209
      %p315 = pneg %p206
      %p316 = pneg %p235
      %p317 = pneg %p232
      %p318 = scmp.lt.s32.totalorder %s20, 1
      %s319 = scalar_select %p318, %s20, 1
      %s320 = smul.addr %s319, 32
      %s321 = smul.addr %s320, 8
      %s322 = scalar_lea.vmem %s9, %s321
      %p323 = scmp.lt.s32.totalorder %s20, 1
      %s324 = scalar_select %p323, %s20, 1
      %s325 = smul.addr %s324, 32
      %s326 = smul.addr %s325, 4
      %s327 = scalar_lea.vmem %s0, %s326
      %p328 = scmp.lt.s32.totalorder %s20, 1
      %s329 = scalar_select %p328, %s20, 1
      %s330 = smul.addr %s329, 32
      %s331 = smul.addr %s330, 8
      %s332 = scalar_lea.vmem %s9, %s331
      %v334 = vld [vmem:[%s327] sm:$0xf]
      %v335 = vld [vmem:[%s327 + $0x4] sm:$0xf]
      %v336 = vld [vmem:[%s327 + $0x8] sm:$0xf]
      %v337 = vld [vmem:[%s327 + $0xc] sm:$0xf]
      %v338 = vld [vmem:[%s327 + $0x10] sm:$0xf]
      %v339 = vld [vmem:[%s327 + $0x14] sm:$0xf]
      %v340 = vld [vmem:[%s327 + $0x18] sm:$0xf]
      %v341 = vld [vmem:[%s327 + $0x1c] sm:$0xf]
      %v342 = vld [vmem:[%s327 + $0x20] sm:$0xf]
      %v343 = vld [vmem:[%s327 + $0x24] sm:$0xf]
      %v344 = vld [vmem:[%s327 + $0x28] sm:$0xf]
      %v345 = vld [vmem:[%s327 + $0x2c] sm:$0xf]
      %v346 = vld [vmem:[%s327 + $0x30] sm:$0xf]
      %v347 = vld [vmem:[%s327 + $0x34] sm:$0xf]
      %v348 = vld [vmem:[%s327 + $0x38] sm:$0xf]
      %v349 = vld [vmem:[%s327 + $0x3c] sm:$0xf]
      %v350 = vld [vmem:[%s327 + $0x40] sm:$0xf]
      %v351 = vld [vmem:[%s327 + $0x44] sm:$0xf]
      %v352 = vld [vmem:[%s327 + $0x48] sm:$0xf]
      %v353 = vld [vmem:[%s327 + $0x4c] sm:$0xf]
      %v354 = vld [vmem:[%s327 + $0x50] sm:$0xf]
      %v355 = vld [vmem:[%s327 + $0x54] sm:$0xf]
      %v356 = vld [vmem:[%s327 + $0x58] sm:$0xf]
      %v357 = vld [vmem:[%s327 + $0x5c] sm:$0xf]
      %v358 = vld [vmem:[%s327 + $0x60] sm:$0xf]
      %v359 = vld [vmem:[%s327 + $0x64] sm:$0xf]
      %v360 = vld [vmem:[%s327 + $0x68] sm:$0xf]
      %v361 = vld [vmem:[%s327 + $0x6c] sm:$0xf]
      %v362 = vld [vmem:[%s327 + $0x70] sm:$0xf]
      %v363 = vld [vmem:[%s327 + $0x74] sm:$0xf]
      %v364 = vld [vmem:[%s327 + $0x78] sm:$0xf]
      %v365 = vld [vmem:[%s327 + $0x7c] sm:$0xf]
      %v366 = vld [vmem:[%s1] sm:$0x3]
      %v367 = vld [vmem:[%s2] sm:$0x1]
      %v369 = vlaneseq
      %v370 = vshrl.u32 %v369, 7
      %v371 = vsub.s32 0, %v370
      %v372 = vrot.slane %v367, %v371
      %v406 = vunpack.c.l.b16 %v334
      %v407 = vunpack.c.l.b16 %v335
      %v408 = vunpack.c.l.b16 %v336
      %v409 = vunpack.c.l.b16 %v337
      %v410 = vunpack.c.l.b16 %v338
      %v411 = vunpack.c.l.b16 %v339
      %v412 = vunpack.c.l.b16 %v340
      %v413 = vunpack.c.l.b16 %v341
      %v414 = vunpack.c.l.b16 %v342
      %v415 = vunpack.c.l.b16 %v343
      %v416 = vunpack.c.l.b16 %v344
      %v417 = vunpack.c.l.b16 %v345
      %v418 = vunpack.c.l.b16 %v346
      %v419 = vunpack.c.l.b16 %v347
      %v420 = vunpack.c.l.b16 %v348
      %v421 = vunpack.c.l.b16 %v349
      %v422 = vunpack.c.l.b16 %v350
      %v423 = vunpack.c.l.b16 %v351
      %v424 = vunpack.c.l.b16 %v352
      %v425 = vunpack.c.l.b16 %v353
      %v426 = vunpack.c.l.b16 %v354
      %v427 = vunpack.c.l.b16 %v355
      %v428 = vunpack.c.l.b16 %v356
      %v429 = vunpack.c.l.b16 %v357
      %v430 = vunpack.c.l.b16 %v358
      %v431 = vunpack.c.l.b16 %v359
      %v432 = vunpack.c.l.b16 %v360
      %v433 = vunpack.c.l.b16 %v361
      %v434 = vunpack.c.l.b16 %v362
      %v435 = vunpack.c.l.b16 %v363
      %v436 = vunpack.c.l.b16 %v364
      %v437 = vunpack.c.l.b16 %v365
      %v438 = vpack.c.b16 %v407, %v406
      %v439 = vpack.c.b16 %v409, %v408
      %v440 = vpack.c.b16 %v411, %v410
      %v441 = vpack.c.b16 %v413, %v412
      %v442 = vpack.c.b16 %v415, %v414
      %v443 = vpack.c.b16 %v417, %v416
      %v444 = vpack.c.b16 %v419, %v418
      %v445 = vpack.c.b16 %v421, %v420
      %v446 = vpack.c.b16 %v423, %v422
      %v447 = vpack.c.b16 %v425, %v424
      %v448 = vpack.c.b16 %v427, %v426
      %v449 = vpack.c.b16 %v429, %v428
      %v450 = vpack.c.b16 %v431, %v430
      %v451 = vpack.c.b16 %v433, %v432
      %v452 = vpack.c.b16 %v435, %v434
      %v453 = vpack.c.b16 %v437, %v436
      %vm454 = vcmask 31744
      %v456 = vsel %vm454, %v438, 0
      %v459 = vsel %vm454, %v439, 0
      %v462 = vsel %vm454, %v440, 0
      %v465 = vsel %vm454, %v441, 0
      %v468 = vsel %vm454, %v442, 0
      %v471 = vsel %vm454, %v443, 0
      %v474 = vsel %vm454, %v444, 0
      %v477 = vsel %vm454, %v445, 0
      %v480 = vsel %vm454, %v446, 0
      %v483 = vsel %vm454, %v447, 0
      %v486 = vsel %vm454, %v448, 0
      %v489 = vsel %vm454, %v449, 0
      %v492 = vsel %vm454, %v450, 0
      %v495 = vsel %vm454, %v451, 0
      %v498 = vsel %vm454, %v452, 0
      %v501 = vsel %vm454, %v453, 0
      %vm503 = vcmask 1041408
      %v505 = vsel %vm503, %v366, 0
      %507 = vmatprep.subr.bf16.mxu0 0
      %508 = vmatpush1.bf16.msra.mxu0 %v505
      %509 = vmatprep.subr.bf16.mxu0 0
      %510 = vmatpush1.bf16.msra.mxu0 0
      %511 = vmatprep.subr.bf16.mxu0 0
      %512 = vmatpush1.bf16.msra.mxu0 0
      %513 = vmatprep.subr.bf16.mxu0 0
      %514 = vmatpush1.bf16.msra.mxu0 0
      %515 = vmatprep.subr.bf16.mxu0 0
      %516 = vmatpush1.bf16.msra.mxu0 0
      %517 = vmatprep.subr.bf16.mxu0 0
      %518 = vmatpush1.bf16.msra.mxu0 0
      %519 = vmatprep.subr.bf16.mxu0 0
      %520 = vmatpush1.bf16.msra.mxu0 0
      %521 = vmatprep.subr.bf16.mxu0 0
      %522 = vmatpush1.bf16.msra.mxu0 0
      %523 = vmatprep.subr.bf16.mxu0 0
      %524 = vmatpush1.bf16.msra.mxu0 0
      %525 = vmatprep.subr.bf16.mxu0 0
      %526 = vmatpush1.bf16.msra.mxu0 0
      %527 = vmatprep.subr.bf16.mxu0 0
      %528 = vmatpush1.bf16.msra.mxu0 0
      %529 = vmatprep.subr.bf16.mxu0 0
      %530 = vmatpush1.bf16.msra.mxu0 0
      %531 = vmatprep.subr.bf16.mxu0 0
      %532 = vmatpush1.bf16.msra.mxu0 0
      %533 = vmatprep.subr.bf16.mxu0 0
      %534 = vmatpush1.bf16.msra.mxu0 0
      %535 = vmatprep.subr.bf16.mxu0 0
      %536 = vmatpush1.bf16.msra.mxu0 0
      %537 = vmatprep.subr.bf16.mxu0 0
      %538 = vmatpush1.bf16.msra.mxu0 0
      %539 = vmatprep.mubr.bf16.mxu0 0
      %540 = vmatmul.mubr.bf16.gmra.mrb[0].mxu0 %v456
      %v541 = vpop.f32.mrb[0].mxu0
      %v542 = vadd.f32 %v372, %v541
      %v543 = vpop.f32.mrb[0].mxu0
      %v544 = vpop.f32.mrb[0].mxu0
      %v545 = vadd.f32 %v372, %v544
      %v546 = vpop.f32.mrb[0].mxu0
      %547 = vmatprep.mubr.bf16.mxu0 0
      %548 = vmatmul.mubr.bf16.gmra.mrb[0].mxu0 %v459
      %v549 = vpop.f32.mrb[0].mxu0
      %v550 = vadd.f32 %v372, %v549
      %v551 = vpop.f32.mrb[0].mxu0
      %v552 = vpop.f32.mrb[0].mxu0
      %v553 = vadd.f32 %v372, %v552
      %v554 = vpop.f32.mrb[0].mxu0
      %555 = vmatprep.mubr.bf16.mxu0 0
      %556 = vmatmul.mubr.bf16.gmra.mrb[0].mxu0 %v462
      %v557 = vpop.f32.mrb[0].mxu0
      %v558 = vadd.f32 %v372, %v557
      %v559 = vpop.f32.mrb[0].mxu0
      %v560 = vpop.f32.mrb[0].mxu0
      %v561 = vadd.f32 %v372, %v560
      %v562 = vpop.f32.mrb[0].mxu0
      %563 = vmatprep.mubr.bf16.mxu0 0
      %564 = vmatmul.mubr.bf16.gmra.mrb[0].mxu0 %v465
      %v565 = vpop.f32.mrb[0].mxu0
      %v566 = vadd.f32 %v372, %v565
      %v567 = vpop.f32.mrb[0].mxu0
      %v568 = vpop.f32.mrb[0].mxu0
      %v569 = vadd.f32 %v372, %v568
      %v570 = vpop.f32.mrb[0].mxu0
      %571 = vmatprep.mubr.bf16.mxu0 0
      %572 = vmatmul.mubr.bf16.gmra.mrb[0].mxu0 %v468
      %v573 = vpop.f32.mrb[0].mxu0
      %v574 = vadd.f32 %v372, %v573
      %v575 = vpop.f32.mrb[0].mxu0
      %v576 = vpop.f32.mrb[0].mxu0
      %v577 = vadd.f32 %v372, %v576
      %v578 = vpop.f32.mrb[0].mxu0
      %579 = vmatprep.mubr.bf16.mxu0 0
      %580 = vmatmul.mubr.bf16.gmra.mrb[0].mxu0 %v471
      %v581 = vpop.f32.mrb[0].mxu0
      %v582 = vadd.f32 %v372, %v581
      %v583 = vpop.f32.mrb[0].mxu0
      %v584 = vpop.f32.mrb[0].mxu0
      %v585 = vadd.f32 %v372, %v584
      %v586 = vpop.f32.mrb[0].mxu0
      %587 = vmatprep.mubr.bf16.mxu0 0
      %588 = vmatmul.mubr.bf16.gmra.mrb[0].mxu0 %v474
      %v589 = vpop.f32.mrb[0].mxu0
      %v590 = vadd.f32 %v372, %v589
      %v591 = vpop.f32.mrb[0].mxu0
      %v592 = vpop.f32.mrb[0].mxu0
      %v593 = vadd.f32 %v372, %v592
      %v594 = vpop.f32.mrb[0].mxu0
      %595 = vmatprep.mubr.bf16.mxu0 0
      %596 = vmatmul.mubr.bf16.gmra.mrb[0].mxu0 %v477
      %v597 = vpop.f32.mrb[0].mxu0
      %v598 = vadd.f32 %v372, %v597
      %v599 = vpop.f32.mrb[0].mxu0
      %v600 = vpop.f32.mrb[0].mxu0
      %v601 = vadd.f32 %v372, %v600
      %v602 = vpop.f32.mrb[0].mxu0
      %603 = vmatprep.mubr.bf16.mxu0 0
      %604 = vmatmul.mubr.bf16.gmra.mrb[0].mxu0 %v480
      %v605 = vpop.f32.mrb[0].mxu0
      %v606 = vadd.f32 %v372, %v605
      %v607 = vpop.f32.mrb[0].mxu0
      %v608 = vpop.f32.mrb[0].mxu0
      %v609 = vadd.f32 %v372, %v608
      %v610 = vpop.f32.mrb[0].mxu0
      %611 = vmatprep.mubr.bf16.mxu0 0
      %612 = vmatmul.mubr.bf16.gmra.mrb[0].mxu0 %v483
      %v613 = vpop.f32.mrb[0].mxu0
      %v614 = vadd.f32 %v372, %v613
      %v615 = vpop.f32.mrb[0].mxu0
      %v616 = vpop.f32.mrb[0].mxu0
      %v617 = vadd.f32 %v372, %v616
      %v618 = vpop.f32.mrb[0].mxu0
      %619 = vmatprep.mubr.bf16.mxu0 0
      %620 = vmatmul.mubr.bf16.gmra.mrb[0].mxu0 %v486
      %v621 = vpop.f32.mrb[0].mxu0
      %v622 = vadd.f32 %v372, %v621
      %v623 = vpop.f32.mrb[0].mxu0
      %v624 = vpop.f32.mrb[0].mxu0
      %v625 = vadd.f32 %v372, %v624
      %v626 = vpop.f32.mrb[0].mxu0
      %627 = vmatprep.mubr.bf16.mxu0 0
      %628 = vmatmul.mubr.bf16.gmra.mrb[0].mxu0 %v489
      %v629 = vpop.f32.mrb[0].mxu0
      %v630 = vadd.f32 %v372, %v629
      %v631 = vpop.f32.mrb[0].mxu0
      %v632 = vpop.f32.mrb[0].mxu0
      %v633 = vadd.f32 %v372, %v632
      %v634 = vpop.f32.mrb[0].mxu0
      %635 = vmatprep.mubr.bf16.mxu0 0
      %636 = vmatmul.mubr.bf16.gmra.mrb[0].mxu0 %v492
      %v637 = vpop.f32.mrb[0].mxu0
      %v638 = vadd.f32 %v372, %v637
      %v639 = vpop.f32.mrb[0].mxu0
      %v640 = vpop.f32.mrb[0].mxu0
      %v641 = vadd.f32 %v372, %v640
      %v642 = vpop.f32.mrb[0].mxu0
      %643 = vmatprep.mubr.bf16.mxu0 0
      %644 = vmatmul.mubr.bf16.gmra.mrb[0].mxu0 %v495
      %v645 = vpop.f32.mrb[0].mxu0
      %v646 = vadd.f32 %v372, %v645
      %v647 = vpop.f32.mrb[0].mxu0
      %v648 = vpop.f32.mrb[0].mxu0
      %v649 = vadd.f32 %v372, %v648
      %v650 = vpop.f32.mrb[0].mxu0
      %651 = vmatprep.mubr.bf16.mxu0 0
      %652 = vmatmul.mubr.bf16.gmra.mrb[0].mxu0 %v498
      %v653 = vpop.f32.mrb[0].mxu0
      %v654 = vadd.f32 %v372, %v653
      %v655 = vpop.f32.mrb[0].mxu0
      %v656 = vpop.f32.mrb[0].mxu0
      %v657 = vadd.f32 %v372, %v656
      %v658 = vpop.f32.mrb[0].mxu0
      %659 = vmatprep.mubr.bf16.mxu0 0
      %660 = vmatmul.mubr.bf16.gmra.mrb[0].mxu0 %v501
      %v661 = vpop.f32.mrb[0].mxu0
      %v662 = vadd.f32 %v372, %v661
      %v663 = vpop.f32.mrb[0].mxu0
      %v664 = vpop.f32.mrb[0].mxu0
      %v665 = vadd.f32 %v372, %v664
      %v666 = vpop.f32.mrb[0].mxu0
      %667 = vdwg.mxu0
      %v668 = vmax.f32 %v542, 0.0
      %v669 = vmax.f32 %v545, 0.0
      %v670 = vmax.f32 %v550, 0.0
      %v671 = vmax.f32 %v553, 0.0
      %v672 = vmax.f32 %v558, 0.0
      %v673 = vmax.f32 %v561, 0.0
      %v674 = vmax.f32 %v566, 0.0
      %v675 = vmax.f32 %v569, 0.0
      %v676 = vmax.f32 %v574, 0.0
      %v677 = vmax.f32 %v577, 0.0
      %v678 = vmax.f32 %v582, 0.0
      %v679 = vmax.f32 %v585, 0.0
      %v680 = vmax.f32 %v590, 0.0
      %v681 = vmax.f32 %v593, 0.0
      %v682 = vmax.f32 %v598, 0.0
      %v683 = vmax.f32 %v601, 0.0
      %v684 = vmax.f32 %v606, 0.0
      %v685 = vmax.f32 %v609, 0.0
      %v686 = vmax.f32 %v614, 0.0
      %v687 = vmax.f32 %v617, 0.0
      %v688 = vmax.f32 %v622, 0.0
      %v689 = vmax.f32 %v625, 0.0
      %v690 = vmax.f32 %v630, 0.0
      %v691 = vmax.f32 %v633, 0.0
      %v692 = vmax.f32 %v638, 0.0
      %v693 = vmax.f32 %v641, 0.0
      %v694 = vmax.f32 %v646, 0.0
      %v695 = vmax.f32 %v649, 0.0
      %v696 = vmax.f32 %v654, 0.0
      %v697 = vmax.f32 %v657, 0.0
      %v698 = vmax.f32 %v662, 0.0
      %v699 = vmax.f32 %v665, 0.0
      %v700 = vpack.c.bf16 %v669, %v668
      %v701 = vpack.c.bf16 %v671, %v670
      %v702 = vpack.c.bf16 %v673, %v672
      %v703 = vpack.c.bf16 %v675, %v674
      %v704 = vpack.c.bf16 %v677, %v676
      %v705 = vpack.c.bf16 %v679, %v678
      %v706 = vpack.c.bf16 %v681, %v680
      %v707 = vpack.c.bf16 %v683, %v682
      %v708 = vpack.c.bf16 %v685, %v684
      %v709 = vpack.c.bf16 %v687, %v686
      %v710 = vpack.c.bf16 %v689, %v688
      %v711 = vpack.c.bf16 %v691, %v690
      %v712 = vpack.c.bf16 %v693, %v692
      %v713 = vpack.c.bf16 %v695, %v694
      %v714 = vpack.c.bf16 %v697, %v696
      %v715 = vpack.c.bf16 %v699, %v698
      %v717 = vshrl.u32 0, 16
      %v719 = vrot.slane %v717, 7
      %v720 = vshll.u32 0, 16
      %v722 = vor.u32 %v719, %v720
      %v724 = vshrl.u32 %v700, 16
      %v726 = vrot.slane %v724, 7
      %v727 = vshll.u32 %v700, 16
      %v729 = vor.u32 %v726, %v727
      %v731 = vshrl.u32 %v701, 16
      %v733 = vrot.slane %v731, 7
      %v734 = vshll.u32 %v701, 16
      %v736 = vor.u32 %v733, %v734
      %v738 = vshrl.u32 %v702, 16
      %v740 = vrot.slane %v738, 7
      %v741 = vshll.u32 %v702, 16
      %v743 = vor.u32 %v740, %v741
      %v745 = vshrl.u32 %v703, 16
      %v747 = vrot.slane %v745, 7
      %v748 = vshll.u32 %v703, 16
      %v750 = vor.u32 %v747, %v748
      %v752 = vshrl.u32 %v704, 16
      %v754 = vrot.slane %v752, 7
      %v755 = vshll.u32 %v704, 16
      %v757 = vor.u32 %v754, %v755
      %v759 = vshrl.u32 %v705, 16
      %v761 = vrot.slane %v759, 7
      %v762 = vshll.u32 %v705, 16
      %v764 = vor.u32 %v761, %v762
      %v766 = vshrl.u32 %v706, 16
      %v768 = vrot.slane %v766, 7
      %v769 = vshll.u32 %v706, 16
      %v771 = vor.u32 %v768, %v769
      %v773 = vshrl.u32 %v707, 16
      %v775 = vrot.slane %v773, 7
      %v776 = vshll.u32 %v707, 16
      %v778 = vor.u32 %v775, %v776
      %v780 = vshrl.u32 %v708, 16
      %v782 = vrot.slane %v780, 7
      %v783 = vshll.u32 %v708, 16
      %v785 = vor.u32 %v782, %v783
      %v787 = vshrl.u32 %v709, 16
      %v789 = vrot.slane %v787, 7
      %v790 = vshll.u32 %v709, 16
      %v792 = vor.u32 %v789, %v790
      %v794 = vshrl.u32 %v710, 16
      %v796 = vrot.slane %v794, 7
      %v797 = vshll.u32 %v710, 16
      %v799 = vor.u32 %v796, %v797
      %v801 = vshrl.u32 %v711, 16
      %v803 = vrot.slane %v801, 7
      %v804 = vshll.u32 %v711, 16
      %v806 = vor.u32 %v803, %v804
      %v808 = vshrl.u32 %v712, 16
      %v810 = vrot.slane %v808, 7
      %v811 = vshll.u32 %v712, 16
      %v813 = vor.u32 %v810, %v811
      %v815 = vshrl.u32 %v713, 16
      %v817 = vrot.slane %v815, 7
      %v818 = vshll.u32 %v713, 16
      %v820 = vor.u32 %v817, %v818
      %v822 = vshrl.u32 %v714, 16
      %v824 = vrot.slane %v822, 7
      %v825 = vshll.u32 %v714, 16
      %v827 = vor.u32 %v824, %v825
      %v829 = vshrl.u32 %v715, 16
      %v831 = vrot.slane %v829, 7
      %v832 = vshll.u32 %v715, 16
      %v834 = vor.u32 %v831, %v832
      %vm869 = vcmask 1040384
      %vm870 = vsmask.f32 256
      %vm871 = vmand %vm869, %vm870
      %v872 = vsel %vm871, 0, %v722
      %v873 = vsel %vm871, 0, %v729
      %v874 = vsel %vm871, 0, %v736
      %v875 = vsel %vm871, 0, %v743
      %v876 = vsel %vm871, 0, %v750
      %v877 = vsel %vm871, 0, %v757
      %v878 = vsel %vm871, 0, %v764
      %v879 = vsel %vm871, 0, %v771
      %v880 = vsel %vm871, 0, %v778
      %v881 = vsel %vm871, 0, %v785
      %v882 = vsel %vm871, 0, %v792
      %v883 = vsel %vm871, 0, %v799
      %v884 = vsel %vm871, 0, %v806
      %v885 = vsel %vm871, 0, %v813
      %v886 = vsel %vm871, 0, %v820
      %v887 = vsel %vm871, 0, %v827
      %v888 = vsel %vm871, 0, %v834
      %v889 = vsel %vm871, %v719, 0
      %v890 = vsel %vm871, %v726, 0
      %v891 = vsel %vm871, %v733, 0
      %v892 = vsel %vm871, %v740, 0
      %v893 = vsel %vm871, %v747, 0
      %v894 = vsel %vm871, %v754, 0
      %v895 = vsel %vm871, %v761, 0
      %v896 = vsel %vm871, %v768, 0
      %v897 = vsel %vm871, %v775, 0
      %v898 = vsel %vm871, %v782, 0
      %v899 = vsel %vm871, %v789, 0
      %v900 = vsel %vm871, %v796, 0
      %v901 = vsel %vm871, %v803, 0
      %v902 = vsel %vm871, %v810, 0
      %v903 = vsel %vm871, %v817, 0
      %v904 = vsel %vm871, %v824, 0
      %v905 = vsel %vm871, %v831, 0
      %vm906 = vsmask.f32 7424
      %v908 = vshrl.u32 %v872, 16
      %v910 = vshll.u32 %v872, 16
      %v912 = vrot.slane %v910, 1
      %v913 = vor.u32 %v908, %v912
      %v915 = vshll.u32 %v889, 16
      %v917 = vrot.slane %v915, 1
      %v918 = vsel %vm906, %v913, %v917
      %v920 = vshrl.u32 %v873, 16
      %v922 = vshll.u32 %v873, 16
      %v924 = vrot.slane %v922, 1
      %v925 = vor.u32 %v920, %v924
      %v927 = vshll.u32 %v890, 16
      %v929 = vrot.slane %v927, 1
      %v930 = vsel %vm906, %v925, %v929
      %v932 = vshrl.u32 %v874, 16
      %v934 = vshll.u32 %v874, 16
      %v936 = vrot.slane %v934, 1
      %v937 = vor.u32 %v932, %v936
      %v939 = vshll.u32 %v891, 16
      %v941 = vrot.slane %v939, 1
      %v942 = vsel %vm906, %v937, %v941
      %v944 = vshrl.u32 %v875, 16
      %v946 = vshll.u32 %v875, 16
      %v948 = vrot.slane %v946, 1
      %v949 = vor.u32 %v944, %v948
      %v951 = vshll.u32 %v892, 16
      %v953 = vrot.slane %v951, 1
      %v954 = vsel %vm906, %v949, %v953
      %v956 = vshrl.u32 %v876, 16
      %v958 = vshll.u32 %v876, 16
      %v960 = vrot.slane %v958, 1
      %v961 = vor.u32 %v956, %v960
      %v963 = vshll.u32 %v893, 16
      %v965 = vrot.slane %v963, 1
      %v966 = vsel %vm906, %v961, %v965
      %v968 = vshrl.u32 %v877, 16
      %v970 = vshll.u32 %v877, 16
      %v972 = vrot.slane %v970, 1
      %v973 = vor.u32 %v968, %v972
      %v975 = vshll.u32 %v894, 16
      %v977 = vrot.slane %v975, 1
      %v978 = vsel %vm906, %v973, %v977
      %v980 = vshrl.u32 %v878, 16
      %v982 = vshll.u32 %v878, 16
      %v984 = vrot.slane %v982, 1
      %v985 = vor.u32 %v980, %v984
      %v987 = vshll.u32 %v895, 16
      %v989 = vrot.slane %v987, 1
      %v990 = vsel %vm906, %v985, %v989
      %v992 = vshrl.u32 %v879, 16
      %v994 = vshll.u32 %v879, 16
      %v996 = vrot.slane %v994, 1
      %v997 = vor.u32 %v992, %v996
      %v999 = vshll.u32 %v896, 16
      %v1001 = vrot.slane %v999, 1
      %v1002 = vsel %vm906, %v997, %v1001
      %v1004 = vshrl.u32 %v880, 16
      %v1006 = vshll.u32 %v880, 16
      %v1008 = vrot.slane %v1006, 1
      %v1009 = vor.u32 %v1004, %v1008
      %v1011 = vshll.u32 %v897, 16
      %v1013 = vrot.slane %v1011, 1
      %v1014 = vsel %vm906, %v1009, %v1013
      %v1016 = vshrl.u32 %v881, 16
      %v1018 = vshll.u32 %v881, 16
      %v1020 = vrot.slane %v1018, 1
      %v1021 = vor.u32 %v1016, %v1020
      %v1023 = vshll.u32 %v898, 16
      %v1025 = vrot.slane %v1023, 1
      %v1026 = vsel %vm906, %v1021, %v1025
      %v1028 = vshrl.u32 %v882, 16
      %v1030 = vshll.u32 %v882, 16
      %v1032 = vrot.slane %v1030, 1
      %v1033 = vor.u32 %v1028, %v1032
      %v1035 = vshll.u32 %v899, 16
      %v1037 = vrot.slane %v1035, 1
      %v1038 = vsel %vm906, %v1033, %v1037
      %v1040 = vshrl.u32 %v883, 16
      %v1042 = vshll.u32 %v883, 16
      %v1044 = vrot.slane %v1042, 1
      %v1045 = vor.u32 %v1040, %v1044
      %v1047 = vshll.u32 %v900, 16
      %v1049 = vrot.slane %v1047, 1
      %v1050 = vsel %vm906, %v1045, %v1049
      %v1052 = vshrl.u32 %v884, 16
      %v1054 = vshll.u32 %v884, 16
      %v1056 = vrot.slane %v1054, 1
      %v1057 = vor.u32 %v1052, %v1056
      %v1059 = vshll.u32 %v901, 16
      %v1061 = vrot.slane %v1059, 1
      %v1062 = vsel %vm906, %v1057, %v1061
      %v1064 = vshrl.u32 %v885, 16
      %v1066 = vshll.u32 %v885, 16
      %v1068 = vrot.slane %v1066, 1
      %v1069 = vor.u32 %v1064, %v1068
      %v1071 = vshll.u32 %v902, 16
      %v1073 = vrot.slane %v1071, 1
      %v1074 = vsel %vm906, %v1069, %v1073
      %v1076 = vshrl.u32 %v886, 16
      %v1078 = vshll.u32 %v886, 16
      %v1080 = vrot.slane %v1078, 1
      %v1081 = vor.u32 %v1076, %v1080
      %v1083 = vshll.u32 %v903, 16
      %v1085 = vrot.slane %v1083, 1
      %v1086 = vsel %vm906, %v1081, %v1085
      %v1088 = vshrl.u32 %v887, 16
      %v1090 = vshll.u32 %v887, 16
      %v1092 = vrot.slane %v1090, 1
      %v1093 = vor.u32 %v1088, %v1092
      %v1095 = vshll.u32 %v904, 16
      %v1097 = vrot.slane %v1095, 1
      %v1098 = vsel %vm906, %v1093, %v1097
      %1099 = vrot.lane.b32.xlu0 %v918, 4
      %v1100 = vpop.permute.xlu0 %1099
      %1101 = vrot.lane.b32.xlu0 %v930, 4
      %v1102 = vpop.permute.xlu0 %1101
      %1103 = vrot.lane.b32.xlu0 %v942, 4
      %v1104 = vpop.permute.xlu0 %1103
      %1105 = vrot.lane.b32.xlu0 %v954, 4
      %v1106 = vpop.permute.xlu0 %1105
      %1107 = vrot.lane.b32.xlu0 %v966, 4
      %v1108 = vpop.permute.xlu0 %1107
      %1109 = vrot.lane.b32.xlu0 %v978, 4
      %v1110 = vpop.permute.xlu0 %1109
      %1111 = vrot.lane.b32.xlu0 %v990, 4
      %v1112 = vpop.permute.xlu0 %1111
      %1113 = vrot.lane.b32.xlu0 %v1002, 4
      %v1114 = vpop.permute.xlu0 %1113
      %1115 = vrot.lane.b32.xlu0 %v1014, 4
      %v1116 = vpop.permute.xlu0 %1115
      %1117 = vrot.lane.b32.xlu0 %v1026, 4
      %v1118 = vpop.permute.xlu0 %1117
      %1119 = vrot.lane.b32.xlu0 %v1038, 4
      %v1120 = vpop.permute.xlu0 %1119
      %1121 = vrot.lane.b32.xlu0 %v1050, 4
      %v1122 = vpop.permute.xlu0 %1121
      %1123 = vrot.lane.b32.xlu0 %v1062, 4
      %v1124 = vpop.permute.xlu0 %1123
      %1125 = vrot.lane.b32.xlu0 %v1074, 4
      %v1126 = vpop.permute.xlu0 %1125
      %1127 = vrot.lane.b32.xlu0 %v1086, 4
      %v1128 = vpop.permute.xlu0 %1127
      %1129 = vrot.lane.b32.xlu0 %v1098, 4
      %v1130 = vpop.permute.xlu0 %1129
      %vm1163 = vcmask 1046528
      %v1164 = vrot.slane %v872, 1
      %v1165 = vrot.slane %v889, 1
      %v1166 = vsel %vm1163, %v1164, %v1165
      %v1167 = vrot.slane %v873, 1
      %v1168 = vrot.slane %v890, 1
      %v1169 = vsel %vm1163, %v1167, %v1168
      %v1170 = vrot.slane %v874, 1
      %v1171 = vrot.slane %v891, 1
      %v1172 = vsel %vm1163, %v1170, %v1171
      %v1173 = vrot.slane %v875, 1
      %v1174 = vrot.slane %v892, 1
      %v1175 = vsel %vm1163, %v1173, %v1174
      %v1176 = vrot.slane %v876, 1
      %v1177 = vrot.slane %v893, 1
      %v1178 = vsel %vm1163, %v1176, %v1177
      %v1179 = vrot.slane %v877, 1
      %v1180 = vrot.slane %v894, 1
      %v1181 = vsel %vm1163, %v1179, %v1180
      %v1182 = vrot.slane %v878, 1
      %v1183 = vrot.slane %v895, 1
      %v1184 = vsel %vm1163, %v1182, %v1183
      %v1185 = vrot.slane %v879, 1
      %v1186 = vrot.slane %v896, 1
      %v1187 = vsel %vm1163, %v1185, %v1186
      %v1188 = vrot.slane %v880, 1
      %v1189 = vrot.slane %v897, 1
      %v1190 = vsel %vm1163, %v1188, %v1189
      %v1191 = vrot.slane %v881, 1
      %v1192 = vrot.slane %v898, 1
      %v1193 = vsel %vm1163, %v1191, %v1192
      %v1194 = vrot.slane %v882, 1
      %v1195 = vrot.slane %v899, 1
      %v1196 = vsel %vm1163, %v1194, %v1195
      %v1197 = vrot.slane %v883, 1
      %v1198 = vrot.slane %v900, 1
      %v1199 = vsel %vm1163, %v1197, %v1198
      %v1200 = vrot.slane %v884, 1
      %v1201 = vrot.slane %v901, 1
      %v1202 = vsel %vm1163, %v1200, %v1201
      %v1203 = vrot.slane %v885, 1
      %v1204 = vrot.slane %v902, 1
      %v1205 = vsel %vm1163, %v1203, %v1204
      %v1206 = vrot.slane %v886, 1
      %v1207 = vrot.slane %v903, 1
      %v1208 = vsel %vm1163, %v1206, %v1207
      %v1209 = vrot.slane %v887, 1
      %v1210 = vrot.slane %v904, 1
      %v1211 = vsel %vm1163, %v1209, %v1210
      %1212 = vrot.lane.b32.xlu0 %v1166, 8
      %v1213 = vpop.permute.xlu0 %1212
      %1214 = vrot.lane.b32.xlu0 %v1169, 8
      %v1215 = vpop.permute.xlu0 %1214
      %1216 = vrot.lane.b32.xlu0 %v1172, 8
      %v1217 = vpop.permute.xlu0 %1216
      %1218 = vrot.lane.b32.xlu0 %v1175, 8
      %v1219 = vpop.permute.xlu0 %1218
      %1220 = vrot.lane.b32.xlu0 %v1178, 8
      %v1221 = vpop.permute.xlu0 %1220
      %1222 = vrot.lane.b32.xlu0 %v1181, 8
      %v1223 = vpop.permute.xlu0 %1222
      %1224 = vrot.lane.b32.xlu0 %v1184, 8
      %v1225 = vpop.permute.xlu0 %1224
      %1226 = vrot.lane.b32.xlu0 %v1187, 8
      %v1227 = vpop.permute.xlu0 %1226
      %1228 = vrot.lane.b32.xlu0 %v1190, 8
      %v1229 = vpop.permute.xlu0 %1228
      %1230 = vrot.lane.b32.xlu0 %v1193, 8
      %v1231 = vpop.permute.xlu0 %1230
      %1232 = vrot.lane.b32.xlu0 %v1196, 8
      %v1233 = vpop.permute.xlu0 %1232
      %1234 = vrot.lane.b32.xlu0 %v1199, 8
      %v1235 = vpop.permute.xlu0 %1234
      %1236 = vrot.lane.b32.xlu0 %v1202, 8
      %v1237 = vpop.permute.xlu0 %1236
      %1238 = vrot.lane.b32.xlu0 %v1205, 8
      %v1239 = vpop.permute.xlu0 %1238
      %1240 = vrot.lane.b32.xlu0 %v1208, 8
      %v1241 = vpop.permute.xlu0 %1240
      %1242 = vrot.lane.b32.xlu0 %v1211, 8
      %v1243 = vpop.permute.xlu0 %1242
      %1245 = vrot.lane.b32.xlu0 %v873, 12
      %v1246 = vpop.permute.xlu0 %1245
      %1247 = vrot.lane.b32.xlu0 %v874, 12
      %v1248 = vpop.permute.xlu0 %1247
      %1249 = vrot.lane.b32.xlu0 %v875, 12
      %v1250 = vpop.permute.xlu0 %1249
      %1251 = vrot.lane.b32.xlu0 %v876, 12
      %v1252 = vpop.permute.xlu0 %1251
      %1253 = vrot.lane.b32.xlu0 %v877, 12
      %v1254 = vpop.permute.xlu0 %1253
      %1255 = vrot.lane.b32.xlu0 %v878, 12
      %v1256 = vpop.permute.xlu0 %1255
      %1257 = vrot.lane.b32.xlu0 %v879, 12
      %v1258 = vpop.permute.xlu0 %1257
      %1259 = vrot.lane.b32.xlu0 %v880, 12
      %v1260 = vpop.permute.xlu0 %1259
      %1261 = vrot.lane.b32.xlu0 %v881, 12
      %v1262 = vpop.permute.xlu0 %1261
      %1263 = vrot.lane.b32.xlu0 %v882, 12
      %v1264 = vpop.permute.xlu0 %1263
      %1265 = vrot.lane.b32.xlu0 %v883, 12
      %v1266 = vpop.permute.xlu0 %1265
      %1267 = vrot.lane.b32.xlu0 %v884, 12
      %v1268 = vpop.permute.xlu0 %1267
      %1269 = vrot.lane.b32.xlu0 %v885, 12
      %v1270 = vpop.permute.xlu0 %1269
      %1271 = vrot.lane.b32.xlu0 %v886, 12
      %v1272 = vpop.permute.xlu0 %1271
      %1273 = vrot.lane.b32.xlu0 %v887, 12
      %v1274 = vpop.permute.xlu0 %1273
      %1275 = vrot.lane.b32.xlu0 %v888, 12
      %v1276 = vpop.permute.xlu0 %1275
      %v1278 = vshrl.u32 %v888, 16
      %v1280 = vshll.u32 %v888, 16
      %v1282 = vrot.slane %v1280, 1
      %v1283 = vor.u32 %v1278, %v1282
      %v1285 = vshll.u32 %v905, 16
      %v1287 = vrot.slane %v1285, 1
      %v1288 = vsel %vm906, %v1283, %v1287
      %1289 = vrot.lane.b32.xlu0 %v930, 16
      %v1290 = vpop.permute.xlu0 %1289
      %1291 = vrot.lane.b32.xlu0 %v942, 16
      %v1292 = vpop.permute.xlu0 %1291
      %1293 = vrot.lane.b32.xlu0 %v954, 16
      %v1294 = vpop.permute.xlu0 %1293
      %1295 = vrot.lane.b32.xlu0 %v966, 16
      %v1296 = vpop.permute.xlu0 %1295
      %1297 = vrot.lane.b32.xlu0 %v978, 16
      %v1298 = vpop.permute.xlu0 %1297
      %1299 = vrot.lane.b32.xlu0 %v990, 16
      %v1300 = vpop.permute.xlu0 %1299
      %1301 = vrot.lane.b32.xlu0 %v1002, 16
      %v1302 = vpop.permute.xlu0 %1301
      %1303 = vrot.lane.b32.xlu0 %v1014, 16
      %v1304 = vpop.permute.xlu0 %1303
      %1305 = vrot.lane.b32.xlu0 %v1026, 16
      %v1306 = vpop.permute.xlu0 %1305
      %1307 = vrot.lane.b32.xlu0 %v1038, 16
      %v1308 = vpop.permute.xlu0 %1307
      %1309 = vrot.lane.b32.xlu0 %v1050, 16
      %v1310 = vpop.permute.xlu0 %1309
      %1311 = vrot.lane.b32.xlu0 %v1062, 16
      %v1312 = vpop.permute.xlu0 %1311
      %1313 = vrot.lane.b32.xlu0 %v1074, 16
      %v1314 = vpop.permute.xlu0 %1313
      %1315 = vrot.lane.b32.xlu0 %v1086, 16
      %v1316 = vpop.permute.xlu0 %1315
      %1317 = vrot.lane.b32.xlu0 %v1098, 16
      %v1318 = vpop.permute.xlu0 %1317
      %1319 = vrot.lane.b32.xlu0 %v1288, 16
      %v1320 = vpop.permute.xlu0 %1319
      %v1322 = vrot.slane %v888, 1
      %v1323 = vrot.slane %v905, 1
      %v1324 = vsel %vm1163, %v1322, %v1323
      %1325 = vrot.lane.b32.xlu0 %v1169, 20
      %v1326 = vpop.permute.xlu0 %1325
      %1327 = vrot.lane.b32.xlu0 %v1172, 20
      %v1328 = vpop.permute.xlu0 %1327
      %1329 = vrot.lane.b32.xlu0 %v1175, 20
      %v1330 = vpop.permute.xlu0 %1329
      %1331 = vrot.lane.b32.xlu0 %v1178, 20
      %v1332 = vpop.permute.xlu0 %1331
      %1333 = vrot.lane.b32.xlu0 %v1181, 20
      %v1334 = vpop.permute.xlu0 %1333
      %1335 = vrot.lane.b32.xlu0 %v1184, 20
      %v1336 = vpop.permute.xlu0 %1335
      %1337 = vrot.lane.b32.xlu0 %v1187, 20
      %v1338 = vpop.permute.xlu0 %1337
      %1339 = vrot.lane.b32.xlu0 %v1190, 20
      %v1340 = vpop.permute.xlu0 %1339
      %1341 = vrot.lane.b32.xlu0 %v1193, 20
      %v1342 = vpop.permute.xlu0 %1341
      %1343 = vrot.lane.b32.xlu0 %v1196, 20
      %v1344 = vpop.permute.xlu0 %1343
      %1345 = vrot.lane.b32.xlu0 %v1199, 20
      %v1346 = vpop.permute.xlu0 %1345
      %1347 = vrot.lane.b32.xlu0 %v1202, 20
      %v1348 = vpop.permute.xlu0 %1347
      %1349 = vrot.lane.b32.xlu0 %v1205, 20
      %v1350 = vpop.permute.xlu0 %1349
      %1351 = vrot.lane.b32.xlu0 %v1208, 20
      %v1352 = vpop.permute.xlu0 %1351
      %1353 = vrot.lane.b32.xlu0 %v1211, 20
      %v1354 = vpop.permute.xlu0 %1353
      %1355 = vrot.lane.b32.xlu0 %v1324, 20
      %v1356 = vpop.permute.xlu0 %1355
      %1357 = vrot.lane.b32.xlu0 %v874, 24
      %v1358 = vpop.permute.xlu0 %1357
      %1359 = vrot.lane.b32.xlu0 %v875, 24
      %v1360 = vpop.permute.xlu0 %1359
      %1361 = vrot.lane.b32.xlu0 %v876, 24
      %v1362 = vpop.permute.xlu0 %1361
      %1363 = vrot.lane.b32.xlu0 %v877, 24
      %v1364 = vpop.permute.xlu0 %1363
      %1365 = vrot.lane.b32.xlu0 %v878, 24
      %v1366 = vpop.permute.xlu0 %1365
      %1367 = vrot.lane.b32.xlu0 %v879, 24
      %v1368 = vpop.permute.xlu0 %1367
      %1369 = vrot.lane.b32.xlu0 %v880, 24
      %v1370 = vpop.permute.xlu0 %1369
      %1371 = vrot.lane.b32.xlu0 %v881, 24
      %v1372 = vpop.permute.xlu0 %1371
      %1373 = vrot.lane.b32.xlu0 %v882, 24
      %v1374 = vpop.permute.xlu0 %1373
      %1375 = vrot.lane.b32.xlu0 %v883, 24
      %v1376 = vpop.permute.xlu0 %1375
      %1377 = vrot.lane.b32.xlu0 %v884, 24
      %v1378 = vpop.permute.xlu0 %1377
      %1379 = vrot.lane.b32.xlu0 %v885, 24
      %v1380 = vpop.permute.xlu0 %1379
      %1381 = vrot.lane.b32.xlu0 %v886, 24
      %v1382 = vpop.permute.xlu0 %1381
      %1383 = vrot.lane.b32.xlu0 %v887, 24
      %v1384 = vpop.permute.xlu0 %1383
      %1385 = vrot.lane.b32.xlu0 %v888, 24
      %v1386 = vpop.permute.xlu0 %1385
      %1387 = vrot.lane.b32.xlu0 %v872, 24
      %v1388 = vpop.permute.xlu0 %1387
      %1389 = vrot.lane.b32.xlu0 %v942, 28
      %v1390 = vpop.permute.xlu0 %1389
      %1391 = vrot.lane.b32.xlu0 %v954, 28
      %v1392 = vpop.permute.xlu0 %1391
      %1393 = vrot.lane.b32.xlu0 %v966, 28
      %v1394 = vpop.permute.xlu0 %1393
      %1395 = vrot.lane.b32.xlu0 %v978, 28
      %v1396 = vpop.permute.xlu0 %1395
      %1397 = vrot.lane.b32.xlu0 %v990, 28
      %v1398 = vpop.permute.xlu0 %1397
      %1399 = vrot.lane.b32.xlu0 %v1002, 28
      %v1400 = vpop.permute.xlu0 %1399
      %1401 = vrot.lane.b32.xlu0 %v1014, 28
      %v1402 = vpop.permute.xlu0 %1401
      %1403 = vrot.lane.b32.xlu0 %v1026, 28
      %v1404 = vpop.permute.xlu0 %1403
      %1405 = vrot.lane.b32.xlu0 %v1038, 28
      %v1406 = vpop.permute.xlu0 %1405
      %1407 = vrot.lane.b32.xlu0 %v1050, 28
      %v1408 = vpop.permute.xlu0 %1407
      %1409 = vrot.lane.b32.xlu0 %v1062, 28
      %v1410 = vpop.permute.xlu0 %1409
      %1411 = vrot.lane.b32.xlu0 %v1074, 28
      %v1412 = vpop.permute.xlu0 %1411
      %1413 = vrot.lane.b32.xlu0 %v1086, 28
      %v1414 = vpop.permute.xlu0 %1413
      %1415 = vrot.lane.b32.xlu0 %v1098, 28
      %v1416 = vpop.permute.xlu0 %1415
      %1417 = vrot.lane.b32.xlu0 %v1288, 28
      %v1418 = vpop.permute.xlu0 %1417
      %1419 = vrot.lane.b32.xlu0 %v918, 28
      %v1420 = vpop.permute.xlu0 %1419
      %1421 = vrot.lane.b32.xlu0 %v1172, 32
      %v1422 = vpop.permute.xlu0 %1421
      %1423 = vrot.lane.b32.xlu0 %v1175, 32
      %v1424 = vpop.permute.xlu0 %1423
      %1425 = vrot.lane.b32.xlu0 %v1178, 32
      %v1426 = vpop.permute.xlu0 %1425
      %1427 = vrot.lane.b32.xlu0 %v1181, 32
      %v1428 = vpop.permute.xlu0 %1427
      %1429 = vrot.lane.b32.xlu0 %v1184, 32
      %v1430 = vpop.permute.xlu0 %1429
      %1431 = vrot.lane.b32.xlu0 %v1187, 32
      %v1432 = vpop.permute.xlu0 %1431
      %1433 = vrot.lane.b32.xlu0 %v1190, 32
      %v1434 = vpop.permute.xlu0 %1433
      %1435 = vrot.lane.b32.xlu0 %v1193, 32
      %v1436 = vpop.permute.xlu0 %1435
      %1437 = vrot.lane.b32.xlu0 %v1196, 32
      %v1438 = vpop.permute.xlu0 %1437
      %1439 = vrot.lane.b32.xlu0 %v1199, 32
      %v1440 = vpop.permute.xlu0 %1439
      %1441 = vrot.lane.b32.xlu0 %v1202, 32
      %v1442 = vpop.permute.xlu0 %1441
      %1443 = vrot.lane.b32.xlu0 %v1205, 32
      %v1444 = vpop.permute.xlu0 %1443
      %1445 = vrot.lane.b32.xlu0 %v1208, 32
      %v1446 = vpop.permute.xlu0 %1445
      %1447 = vrot.lane.b32.xlu0 %v1211, 32
      %v1448 = vpop.permute.xlu0 %1447
      %1449 = vrot.lane.b32.xlu0 %v1324, 32
      %v1450 = vpop.permute.xlu0 %1449
      %1451 = vrot.lane.b32.xlu0 %v1166, 32
      %v1452 = vpop.permute.xlu0 %1451
      %v1454 = vsel %vm454, %v872, %v1100
      %v1456 = vsel %vm454, %v873, %v1102
      %v1458 = vsel %vm454, %v874, %v1104
      %v1460 = vsel %vm454, %v875, %v1106
      %v1462 = vsel %vm454, %v876, %v1108
      %v1464 = vsel %vm454, %v877, %v1110
      %v1466 = vsel %vm454, %v878, %v1112
      %v1468 = vsel %vm454, %v879, %v1114
      %v1470 = vsel %vm454, %v880, %v1116
      %v1472 = vsel %vm454, %v881, %v1118
      %v1474 = vsel %vm454, %v882, %v1120
      %v1476 = vsel %vm454, %v883, %v1122
      %v1478 = vsel %vm454, %v884, %v1124
      %v1480 = vsel %vm454, %v885, %v1126
      %v1482 = vsel %vm454, %v886, %v1128
      %v1484 = vsel %vm454, %v887, %v1130
      %vm1485 = vcmask 64512
      %v1487 = vsel %vm1485, %v1454, %v1213
      %v1489 = vsel %vm1485, %v1456, %v1215
      %v1491 = vsel %vm1485, %v1458, %v1217
      %v1493 = vsel %vm1485, %v1460, %v1219
      %v1495 = vsel %vm1485, %v1462, %v1221
      %v1497 = vsel %vm1485, %v1464, %v1223
      %v1499 = vsel %vm1485, %v1466, %v1225
      %v1501 = vsel %vm1485, %v1468, %v1227
      %v1503 = vsel %vm1485, %v1470, %v1229
      %v1505 = vsel %vm1485, %v1472, %v1231
      %v1507 = vsel %vm1485, %v1474, %v1233
      %v1509 = vsel %vm1485, %v1476, %v1235
      %v1511 = vsel %vm1485, %v1478, %v1237
      %v1513 = vsel %vm1485, %v1480, %v1239
      %v1515 = vsel %vm1485, %v1482, %v1241
      %v1517 = vsel %vm1485, %v1484, %v1243
      %vm1518 = vcmask 97280
      %v1520 = vsel %vm1518, %v1487, %v1246
      %v1522 = vsel %vm1518, %v1489, %v1248
      %v1524 = vsel %vm1518, %v1491, %v1250
      %v1526 = vsel %vm1518, %v1493, %v1252
      %v1528 = vsel %vm1518, %v1495, %v1254
      %v1530 = vsel %vm1518, %v1497, %v1256
      %v1532 = vsel %vm1518, %v1499, %v1258
      %v1534 = vsel %vm1518, %v1501, %v1260
      %v1536 = vsel %vm1518, %v1503, %v1262
      %v1538 = vsel %vm1518, %v1505, %v1264
      %v1540 = vsel %vm1518, %v1507, %v1266
      %v1542 = vsel %vm1518, %v1509, %v1268
      %v1544 = vsel %vm1518, %v1511, %v1270
      %v1546 = vsel %vm1518, %v1513, %v1272
      %v1548 = vsel %vm1518, %v1515, %v1274
      %v1550 = vsel %vm1518, %v1517, %v1276
      %vm1551 = vcmask 130048
      %v1553 = vsel %vm1551, %v1520, %v1290
      %v1555 = vsel %vm1551, %v1522, %v1292
      %v1557 = vsel %vm1551, %v1524, %v1294
      %v1559 = vsel %vm1551, %v1526, %v1296
      %v1561 = vsel %vm1551, %v1528, %v1298
      %v1563 = vsel %vm1551, %v1530, %v1300
      %v1565 = vsel %vm1551, %v1532, %v1302
      %v1567 = vsel %vm1551, %v1534, %v1304
      %v1569 = vsel %vm1551, %v1536, %v1306
      %v1571 = vsel %vm1551, %v1538, %v1308
      %v1573 = vsel %vm1551, %v1540, %v1310
      %v1575 = vsel %vm1551, %v1542, %v1312
      %v1577 = vsel %vm1551, %v1544, %v1314
      %v1579 = vsel %vm1551, %v1546, %v1316
      %v1581 = vsel %vm1551, %v1548, %v1318
      %v1583 = vsel %vm1551, %v1550, %v1320
      %vm1584 = vcmask 162816
      %v1586 = vsel %vm1584, %v1553, %v1326
      %v1588 = vsel %vm1584, %v1555, %v1328
      %v1590 = vsel %vm1584, %v1557, %v1330
      %v1592 = vsel %vm1584, %v1559, %v1332
      %v1594 = vsel %vm1584, %v1561, %v1334
      %v1596 = vsel %vm1584, %v1563, %v1336
      %v1598 = vsel %vm1584, %v1565, %v1338
      %v1600 = vsel %vm1584, %v1567, %v1340
      %v1602 = vsel %vm1584, %v1569, %v1342
      %v1604 = vsel %vm1584, %v1571, %v1344
      %v1606 = vsel %vm1584, %v1573, %v1346
      %v1608 = vsel %vm1584, %v1575, %v1348
      %v1610 = vsel %vm1584, %v1577, %v1350
      %v1612 = vsel %vm1584, %v1579, %v1352
      %v1614 = vsel %vm1584, %v1581, %v1354
      %v1616 = vsel %vm1584, %v1583, %v1356
      %vm1617 = vcmask 195584
      %v1619 = vsel %vm1617, %v1586, %v1358
      %v1621 = vsel %vm1617, %v1588, %v1360
      %v1623 = vsel %vm1617, %v1590, %v1362
      %v1625 = vsel %vm1617, %v1592, %v1364
      %v1627 = vsel %vm1617, %v1594, %v1366
      %v1629 = vsel %vm1617, %v1596, %v1368
      %v1631 = vsel %vm1617, %v1598, %v1370
      %v1633 = vsel %vm1617, %v1600, %v1372
      %v1635 = vsel %vm1617, %v1602, %v1374
      %v1637 = vsel %vm1617, %v1604, %v1376
      %v1639 = vsel %vm1617, %v1606, %v1378
      %v1641 = vsel %vm1617, %v1608, %v1380
      %v1643 = vsel %vm1617, %v1610, %v1382
      %v1645 = vsel %vm1617, %v1612, %v1384
      %v1647 = vsel %vm1617, %v1614, %v1386
      %v1649 = vsel %vm1617, %v1616, %v1388
      %vm1650 = vcmask 228352
      %v1652 = vsel %vm1650, %v1619, %v1390
      %v1654 = vsel %vm1650, %v1621, %v1392
      %v1656 = vsel %vm1650, %v1623, %v1394
      %v1658 = vsel %vm1650, %v1625, %v1396
      %v1660 = vsel %vm1650, %v1627, %v1398
      %v1662 = vsel %vm1650, %v1629, %v1400
      %v1664 = vsel %vm1650, %v1631, %v1402
      %v1666 = vsel %vm1650, %v1633, %v1404
      %v1668 = vsel %vm1650, %v1635, %v1406
      %v1670 = vsel %vm1650, %v1637, %v1408
      %v1672 = vsel %vm1650, %v1639, %v1410
      %v1674 = vsel %vm1650, %v1641, %v1412
      %v1676 = vsel %vm1650, %v1643, %v1414
      %v1678 = vsel %vm1650, %v1645, %v1416
      %v1680 = vsel %vm1650, %v1647, %v1418
      %v1682 = vsel %vm1650, %v1649, %v1420
      %vm1683 = vcmask 261120
      %v1685 = vsel %vm1683, %v1652, %v1422
      %v1687 = vsel %vm1683, %v1654, %v1424
      %v1689 = vsel %vm1683, %v1656, %v1426
      %v1691 = vsel %vm1683, %v1658, %v1428
      %v1693 = vsel %vm1683, %v1660, %v1430
      %v1695 = vsel %vm1683, %v1662, %v1432
      %v1697 = vsel %vm1683, %v1664, %v1434
      %v1699 = vsel %vm1683, %v1666, %v1436
      %v1701 = vsel %vm1683, %v1668, %v1438
      %v1703 = vsel %vm1683, %v1670, %v1440
      %v1705 = vsel %vm1683, %v1672, %v1442
      %v1707 = vsel %vm1683, %v1674, %v1444
      %v1709 = vsel %vm1683, %v1676, %v1446
      %v1711 = vsel %vm1683, %v1678, %v1448
      %v1713 = vsel %vm1683, %v1680, %v1450
      %v1715 = vsel %vm1683, %v1682, %v1452
      %v1716 = vld [vmem:[%s3] sm:$0xf]
      %v1717 = vld [vmem:[%s3 + $0x4] sm:$0xf]
      %v1718 = vld [vmem:[%s3 + $0x8] sm:$0xf]
      %v1719 = vld [vmem:[%s3 + $0xc] sm:$0xf]
      %v1720 = vld [vmem:[%s3 + $0x10] sm:$0x3]
      %v1721 = vld [vmem:[%s4] sm:$0x1]
      %v1723 = vlaneseq
      %v1724 = vshrl.u32 %v1723, 7
      %v1725 = vsub.s32 0, %v1724
      %v1726 = vrot.slane %v1721, %v1725
      %v1733 = vunpack.c.l.b16 %v1716
      %v1734 = vunpack.c.l.b16 %v1717
      %v1735 = vunpack.c.l.b16 %v1718
      %v1736 = vunpack.c.l.b16 %v1719
      %v1737 = vunpack.c.l.b16 %v1720
      %v1738 = vpack.c.b16 %v1734, %v1733
      %v1739 = vpack.c.b16 %v1736, %v1735
      %v1740 = vpack.c.b16 %v1737, %v1737
      %vm1743 = vcmask 293888
      %v1744 = vsel %vm1743, %v1685, 0
      %v1746 = vsel %vm1743, %v1687, 0
      %v1748 = vsel %vm1743, %v1689, 0
      %v1750 = vsel %vm1743, %v1691, 0
      %v1752 = vsel %vm1743, %v1693, 0
      %v1754 = vsel %vm1743, %v1695, 0
      %v1756 = vsel %vm1743, %v1697, 0
      %v1758 = vsel %vm1743, %v1699, 0
      %v1760 = vsel %vm1743, %v1701, 0
      %v1762 = vsel %vm1743, %v1703, 0
      %v1764 = vsel %vm1743, %v1705, 0
      %v1766 = vsel %vm1743, %v1707, 0
      %v1768 = vsel %vm1743, %v1709, 0
      %v1770 = vsel %vm1743, %v1711, 0
      %v1772 = vsel %vm1743, %v1713, 0
      %v1774 = vsel %vm1743, %v1715, 0
      %v1777 = vsel %vm503, %v1740, 0
      %1779 = vmatprep.subr.bf16.mxu0 0
      %1780 = vmatpush1.bf16.msra.mxu0 %v1738
      %1781 = vmatprep.subr.bf16.mxu0 0
      %1782 = vmatpush1.bf16.msra.mxu0 %v1739
      %1783 = vmatprep.subr.bf16.mxu0 0
      %1784 = vmatpush1.bf16.msra.mxu0 %v1777
      %1785 = vmatprep.subr.bf16.mxu0 0
      %1786 = vmatpush1.bf16.msra.mxu0 0
      %1787 = vmatprep.subr.bf16.mxu0 0
      %1788 = vmatpush1.bf16.msra.mxu0 0
      %1789 = vmatprep.subr.bf16.mxu0 0
      %1790 = vmatpush1.bf16.msra.mxu0 0
      %1791 = vmatprep.subr.bf16.mxu0 0
      %1792 = vmatpush1.bf16.msra.mxu0 0
      %1793 = vmatprep.subr.bf16.mxu0 0
      %1794 = vmatpush1.bf16.msra.mxu0 0
      %1795 = vmatprep.subr.bf16.mxu0 0
      %1796 = vmatpush1.bf16.msra.mxu0 0
      %1797 = vmatprep.subr.bf16.mxu0 0
      %1798 = vmatpush1.bf16.msra.mxu0 0
      %1799 = vmatprep.subr.bf16.mxu0 0
      %1800 = vmatpush1.bf16.msra.mxu0 0
      %1801 = vmatprep.subr.bf16.mxu0 0
      %1802 = vmatpush1.bf16.msra.mxu0 0
      %1803 = vmatprep.subr.bf16.mxu0 0
      %1804 = vmatpush1.bf16.msra.mxu0 0
      %1805 = vmatprep.subr.bf16.mxu0 0
      %1806 = vmatpush1.bf16.msra.mxu0 0
      %1807 = vmatprep.subr.bf16.mxu0 0
      %1808 = vmatpush1.bf16.msra.mxu0 0
      %1809 = vmatprep.subr.bf16.mxu0 0
      %1810 = vmatpush1.bf16.msra.mxu0 0
      %1811 = vmatprep.mubr.bf16.mxu0 0
      %1812 = vmatmul.mubr.bf16.gmra.mrb[0].mxu0 %v1744
      %v1813 = vpop.f32.mrb[0].mxu0
      %v1814 = vadd.f32 %v1726, %v1813
      %v1815 = vpop.f32.mrb[0].mxu0
      %v1816 = vpop.f32.mrb[0].mxu0
      %v1817 = vadd.f32 %v1726, %v1816
      %v1818 = vpop.f32.mrb[0].mxu0
      %1819 = vmatprep.mubr.bf16.mxu0 0
      %1820 = vmatmul.mubr.bf16.gmra.mrb[0].mxu0 %v1746
      %v1821 = vpop.f32.mrb[0].mxu0
      %v1822 = vadd.f32 %v1726, %v1821
      %v1823 = vpop.f32.mrb[0].mxu0
      %v1824 = vpop.f32.mrb[0].mxu0
      %v1825 = vadd.f32 %v1726, %v1824
      %v1826 = vpop.f32.mrb[0].mxu0
      %1827 = vmatprep.mubr.bf16.mxu0 0
      %1828 = vmatmul.mubr.bf16.gmra.mrb[0].mxu0 %v1748
      %v1829 = vpop.f32.mrb[0].mxu0
      %v1830 = vadd.f32 %v1726, %v1829
      %v1831 = vpop.f32.mrb[0].mxu0
      %v1832 = vpop.f32.mrb[0].mxu0
      %v1833 = vadd.f32 %v1726, %v1832
      %v1834 = vpop.f32.mrb[0].mxu0
      %1835 = vmatprep.mubr.bf16.mxu0 0
      %1836 = vmatmul.mubr.bf16.gmra.mrb[0].mxu0 %v1750
      %v1837 = vpop.f32.mrb[0].mxu0
      %v1838 = vadd.f32 %v1726, %v1837
      %v1839 = vpop.f32.mrb[0].mxu0
      %v1840 = vpop.f32.mrb[0].mxu0
      %v1841 = vadd.f32 %v1726, %v1840
      %v1842 = vpop.f32.mrb[0].mxu0
      %1843 = vmatprep.mubr.bf16.mxu0 0
      %1844 = vmatmul.mubr.bf16.gmra.mrb[0].mxu0 %v1752
      %v1845 = vpop.f32.mrb[0].mxu0
      %v1846 = vadd.f32 %v1726, %v1845
      %v1847 = vpop.f32.mrb[0].mxu0
      %v1848 = vpop.f32.mrb[0].mxu0
      %v1849 = vadd.f32 %v1726, %v1848
      %v1850 = vpop.f32.mrb[0].mxu0
      %1851 = vmatprep.mubr.bf16.mxu0 0
      %1852 = vmatmul.mubr.bf16.gmra.mrb[0].mxu0 %v1754
      %v1853 = vpop.f32.mrb[0].mxu0
      %v1854 = vadd.f32 %v1726, %v1853
      %v1855 = vpop.f32.mrb[0].mxu0
      %v1856 = vpop.f32.mrb[0].mxu0
      %v1857 = vadd.f32 %v1726, %v1856
      %v1858 = vpop.f32.mrb[0].mxu0
      %1859 = vmatprep.mubr.bf16.mxu0 0
      %1860 = vmatmul.mubr.bf16.gmra.mrb[0].mxu0 %v1756
      %v1861 = vpop.f32.mrb[0].mxu0
      %v1862 = vadd.f32 %v1726, %v1861
      %v1863 = vpop.f32.mrb[0].mxu0
      %v1864 = vpop.f32.mrb[0].mxu0
      %v1865 = vadd.f32 %v1726, %v1864
      %v1866 = vpop.f32.mrb[0].mxu0
      %1867 = vmatprep.mubr.bf16.mxu0 0
      %1868 = vmatmul.mubr.bf16.gmra.mrb[0].mxu0 %v1758
      %v1869 = vpop.f32.mrb[0].mxu0
      %v1870 = vadd.f32 %v1726, %v1869
      %v1871 = vpop.f32.mrb[0].mxu0
      %v1872 = vpop.f32.mrb[0].mxu0
      %v1873 = vadd.f32 %v1726, %v1872
      %v1874 = vpop.f32.mrb[0].mxu0
      %1875 = vmatprep.mubr.bf16.mxu0 0
      %1876 = vmatmul.mubr.bf16.gmra.mrb[0].mxu0 %v1760
      %v1877 = vpop.f32.mrb[0].mxu0
      %v1878 = vadd.f32 %v1726, %v1877
      %v1879 = vpop.f32.mrb[0].mxu0
      %v1880 = vpop.f32.mrb[0].mxu0
      %v1881 = vadd.f32 %v1726, %v1880
      %v1882 = vpop.f32.mrb[0].mxu0
      %1883 = vmatprep.mubr.bf16.mxu0 0
      %1884 = vmatmul.mubr.bf16.gmra.mrb[0].mxu0 %v1762
      %v1885 = vpop.f32.mrb[0].mxu0
      %v1886 = vadd.f32 %v1726, %v1885
      %v1887 = vpop.f32.mrb[0].mxu0
      %v1888 = vpop.f32.mrb[0].mxu0
      %v1889 = vadd.f32 %v1726, %v1888
      %v1890 = vpop.f32.mrb[0].mxu0
      %1891 = vmatprep.mubr.bf16.mxu0 0
      %1892 = vmatmul.mubr.bf16.gmra.mrb[0].mxu0 %v1764
      %v1893 = vpop.f32.mrb[0].mxu0
      %v1894 = vadd.f32 %v1726, %v1893
      %v1895 = vpop.f32.mrb[0].mxu0
      %v1896 = vpop.f32.mrb[0].mxu0
      %v1897 = vadd.f32 %v1726, %v1896
      %v1898 = vpop.f32.mrb[0].mxu0
      %1899 = vmatprep.mubr.bf16.mxu0 0
      %1900 = vmatmul.mubr.bf16.gmra.mrb[0].mxu0 %v1766
      %v1901 = vpop.f32.mrb[0].mxu0
      %v1902 = vadd.f32 %v1726, %v1901
      %v1903 = vpop.f32.mrb[0].mxu0
      %v1904 = vpop.f32.mrb[0].mxu0
      %v1905 = vadd.f32 %v1726, %v1904
      %v1906 = vpop.f32.mrb[0].mxu0
      %1907 = vmatprep.mubr.bf16.mxu0 0
      %1908 = vmatmul.mubr.bf16.gmra.mrb[0].mxu0 %v1768
      %v1909 = vpop.f32.mrb[0].mxu0
      %v1910 = vadd.f32 %v1726, %v1909
      %v1911 = vpop.f32.mrb[0].mxu0
      %v1912 = vpop.f32.mrb[0].mxu0
      %v1913 = vadd.f32 %v1726, %v1912
      %v1914 = vpop.f32.mrb[0].mxu0
      %1915 = vmatprep.mubr.bf16.mxu0 0
      %1916 = vmatmul.mubr.bf16.gmra.mrb[0].mxu0 %v1770
      %v1917 = vpop.f32.mrb[0].mxu0
      %v1918 = vadd.f32 %v1726, %v1917
      %v1919 = vpop.f32.mrb[0].mxu0
      %v1920 = vpop.f32.mrb[0].mxu0
      %v1921 = vadd.f32 %v1726, %v1920
      %v1922 = vpop.f32.mrb[0].mxu0
      %1923 = vmatprep.mubr.bf16.mxu0 0
      %1924 = vmatmul.mubr.bf16.gmra.mrb[0].mxu0 %v1772
      %v1925 = vpop.f32.mrb[0].mxu0
      %v1926 = vadd.f32 %v1726, %v1925
      %v1927 = vpop.f32.mrb[0].mxu0
      %v1928 = vpop.f32.mrb[0].mxu0
      %v1929 = vadd.f32 %v1726, %v1928
      %v1930 = vpop.f32.mrb[0].mxu0
      %1931 = vmatprep.mubr.bf16.mxu0 0
      %1932 = vmatmul.mubr.bf16.gmra.mrb[0].mxu0 %v1774
      %v1933 = vpop.f32.mrb[0].mxu0
      %v1934 = vadd.f32 %v1726, %v1933
      %v1935 = vpop.f32.mrb[0].mxu0
      %v1936 = vpop.f32.mrb[0].mxu0
      %v1937 = vadd.f32 %v1726, %v1936
      %v1938 = vpop.f32.mrb[0].mxu0
      %1939 = vdwg.mxu0
      %v1940 = vmax.f32 %v1814, 0.0
      %v1941 = vmax.f32 %v1817, 0.0
      %v1942 = vmax.f32 %v1822, 0.0
      %v1943 = vmax.f32 %v1825, 0.0
      %v1944 = vmax.f32 %v1830, 0.0
      %v1945 = vmax.f32 %v1833, 0.0
      %v1946 = vmax.f32 %v1838, 0.0
      %v1947 = vmax.f32 %v1841, 0.0
      %v1948 = vmax.f32 %v1846, 0.0
      %v1949 = vmax.f32 %v1849, 0.0
      %v1950 = vmax.f32 %v1854, 0.0
      %v1951 = vmax.f32 %v1857, 0.0
      %v1952 = vmax.f32 %v1862, 0.0
      %v1953 = vmax.f32 %v1865, 0.0
      %v1954 = vmax.f32 %v1870, 0.0
      %v1955 = vmax.f32 %v1873, 0.0
      %v1956 = vmax.f32 %v1878, 0.0
      %v1957 = vmax.f32 %v1881, 0.0
      %v1958 = vmax.f32 %v1886, 0.0
      %v1959 = vmax.f32 %v1889, 0.0
      %v1960 = vmax.f32 %v1894, 0.0
      %v1961 = vmax.f32 %v1897, 0.0
      %v1962 = vmax.f32 %v1902, 0.0
      %v1963 = vmax.f32 %v1905, 0.0
      %v1964 = vmax.f32 %v1910, 0.0
      %v1965 = vmax.f32 %v1913, 0.0
      %v1966 = vmax.f32 %v1918, 0.0
      %v1967 = vmax.f32 %v1921, 0.0
      %v1968 = vmax.f32 %v1926, 0.0
      %v1969 = vmax.f32 %v1929, 0.0
      %v1970 = vmax.f32 %v1934, 0.0
      %v1971 = vmax.f32 %v1937, 0.0
      %v1972 = vpack.c.bf16 %v1941, %v1940
      %v1973 = vpack.c.bf16 %v1943, %v1942
      %v1974 = vpack.c.bf16 %v1945, %v1944
      %v1975 = vpack.c.bf16 %v1947, %v1946
      %v1976 = vpack.c.bf16 %v1949, %v1948
      %v1977 = vpack.c.bf16 %v1951, %v1950
      %v1978 = vpack.c.bf16 %v1953, %v1952
      %v1979 = vpack.c.bf16 %v1955, %v1954
      %v1980 = vpack.c.bf16 %v1957, %v1956
      %v1981 = vpack.c.bf16 %v1959, %v1958
      %v1982 = vpack.c.bf16 %v1961, %v1960
      %v1983 = vpack.c.bf16 %v1963, %v1962
      %v1984 = vpack.c.bf16 %v1965, %v1964
      %v1985 = vpack.c.bf16 %v1967, %v1966
      %v1986 = vpack.c.bf16 %v1969, %v1968
      %v1987 = vpack.c.bf16 %v1971, %v1970
      %v1988 = vld [vmem:[%s5] sm:$0x3]
      %v1989 = vld [vmem:[%s6] sm:$0x1]
      %v1991 = vlaneseq
      %v1992 = vshrl.u32 %v1991, 7
      %v1993 = vsub.s32 0, %v1992
      %v1994 = vrot.slane %v1989, %v1993
      %v1997 = vsel %vm454, %v1972, 0
      %v2000 = vsel %vm454, %v1973, 0
      %v2003 = vsel %vm454, %v1974, 0
      %v2006 = vsel %vm454, %v1975, 0
      %v2009 = vsel %vm454, %v1976, 0
      %v2012 = vsel %vm454, %v1977, 0
      %v2015 = vsel %vm454, %v1978, 0
      %v2018 = vsel %vm454, %v1979, 0
      %v2021 = vsel %vm454, %v1980, 0
      %v2024 = vsel %vm454, %v1981, 0
      %v2027 = vsel %vm454, %v1982, 0
      %v2030 = vsel %vm454, %v1983, 0
      %v2033 = vsel %vm454, %v1984, 0
      %v2036 = vsel %vm454, %v1985, 0
      %v2039 = vsel %vm454, %v1986, 0
      %v2042 = vsel %vm454, %v1987, 0
      %v2045 = vsel %vm503, %v1988, 0
      %2047 = vmatprep.subr.bf16.mxu0 0
      %2048 = vmatpush1.bf16.msra.mxu0 %v2045
      %2049 = vmatprep.subr.bf16.mxu0 0
      %2050 = vmatpush1.bf16.msra.mxu0 0
      %2051 = vmatprep.subr.bf16.mxu0 0
      %2052 = vmatpush1.bf16.msra.mxu0 0
      %2053 = vmatprep.subr.bf16.mxu0 0
      %2054 = vmatpush1.bf16.msra.mxu0 0
      %2055 = vmatprep.subr.bf16.mxu0 0
      %2056 = vmatpush1.bf16.msra.mxu0 0
      %2057 = vmatprep.subr.bf16.mxu0 0
      %2058 = vmatpush1.bf16.msra.mxu0 0
      %2059 = vmatprep.subr.bf16.mxu0 0
      %2060 = vmatpush1.bf16.msra.mxu0 0
      %2061 = vmatprep.subr.bf16.mxu0 0
      %2062 = vmatpush1.bf16.msra.mxu0 0
      %2063 = vmatprep.subr.bf16.mxu0 0
      %2064 = vmatpush1.bf16.msra.mxu0 0
      %2065 = vmatprep.subr.bf16.mxu0 0
      %2066 = vmatpush1.bf16.msra.mxu0 0
      %2067 = vmatprep.subr.bf16.mxu0 0
      %2068 = vmatpush1.bf16.msra.mxu0 0
      %2069 = vmatprep.subr.bf16.mxu0 0
      %2070 = vmatpush1.bf16.msra.mxu0 0
      %2071 = vmatprep.subr.bf16.mxu0 0
      %2072 = vmatpush1.bf16.msra.mxu0 0
      %2073 = vmatprep.subr.bf16.mxu0 0
      %2074 = vmatpush1.bf16.msra.mxu0 0
      %2075 = vmatprep.subr.bf16.mxu0 0
      %2076 = vmatpush1.bf16.msra.mxu0 0
      %2077 = vmatprep.subr.bf16.mxu0 0
      %2078 = vmatpush1.bf16.msra.mxu0 0
      %2079 = vmatprep.mubr.bf16.mxu0 0
      %2080 = vmatmul.mubr.bf16.gmra.mrb[0].mxu0 %v1997
      %v2081 = vpop.f32.mrb[0].mxu0
      %v2082 = vadd.f32 %v1994, %v2081
      %v2083 = vpop.f32.mrb[0].mxu0
      %v2084 = vpop.f32.mrb[0].mxu0
      %v2085 = vadd.f32 %v1994, %v2084
      %v2086 = vpop.f32.mrb[0].mxu0
      %2087 = vmatprep.mubr.bf16.mxu0 0
      %2088 = vmatmul.mubr.bf16.gmra.mrb[0].mxu0 %v2000
      %v2089 = vpop.f32.mrb[0].mxu0
      %v2090 = vadd.f32 %v1994, %v2089
      %v2091 = vpop.f32.mrb[0].mxu0
      %v2092 = vpop.f32.mrb[0].mxu0
      %v2093 = vadd.f32 %v1994, %v2092
      %v2094 = vpop.f32.mrb[0].mxu0
      %2095 = vmatprep.mubr.bf16.mxu0 0
      %2096 = vmatmul.mubr.bf16.gmra.mrb[0].mxu0 %v2003
      %v2097 = vpop.f32.mrb[0].mxu0
      %v2098 = vadd.f32 %v1994, %v2097
      %v2099 = vpop.f32.mrb[0].mxu0
      %v2100 = vpop.f32.mrb[0].mxu0
      %v2101 = vadd.f32 %v1994, %v2100
      %v2102 = vpop.f32.mrb[0].mxu0
      %2103 = vmatprep.mubr.bf16.mxu0 0
      %2104 = vmatmul.mubr.bf16.gmra.mrb[0].mxu0 %v2006
      %v2105 = vpop.f32.mrb[0].mxu0
      %v2106 = vadd.f32 %v1994, %v2105
      %v2107 = vpop.f32.mrb[0].mxu0
      %v2108 = vpop.f32.mrb[0].mxu0
      %v2109 = vadd.f32 %v1994, %v2108
      %v2110 = vpop.f32.mrb[0].mxu0
      %2111 = vmatprep.mubr.bf16.mxu0 0
      %2112 = vmatmul.mubr.bf16.gmra.mrb[0].mxu0 %v2009
      %v2113 = vpop.f32.mrb[0].mxu0
      %v2114 = vadd.f32 %v1994, %v2113
      %v2115 = vpop.f32.mrb[0].mxu0
      %v2116 = vpop.f32.mrb[0].mxu0
      %v2117 = vadd.f32 %v1994, %v2116
      %v2118 = vpop.f32.mrb[0].mxu0
      %2119 = vmatprep.mubr.bf16.mxu0 0
      %2120 = vmatmul.mubr.bf16.gmra.mrb[0].mxu0 %v2012
      %v2121 = vpop.f32.mrb[0].mxu0
      %v2122 = vadd.f32 %v1994, %v2121
      %v2123 = vpop.f32.mrb[0].mxu0
      %v2124 = vpop.f32.mrb[0].mxu0
      %v2125 = vadd.f32 %v1994, %v2124
      %v2126 = vpop.f32.mrb[0].mxu0
      %2127 = vmatprep.mubr.bf16.mxu0 0
      %2128 = vmatmul.mubr.bf16.gmra.mrb[0].mxu0 %v2015
      %v2129 = vpop.f32.mrb[0].mxu0
      %v2130 = vadd.f32 %v1994, %v2129
      %v2131 = vpop.f32.mrb[0].mxu0
      %v2132 = vpop.f32.mrb[0].mxu0
      %v2133 = vadd.f32 %v1994, %v2132
      %v2134 = vpop.f32.mrb[0].mxu0
      %2135 = vmatprep.mubr.bf16.mxu0 0
      %2136 = vmatmul.mubr.bf16.gmra.mrb[0].mxu0 %v2018
      %v2137 = vpop.f32.mrb[0].mxu0
      %v2138 = vadd.f32 %v1994, %v2137
      %v2139 = vpop.f32.mrb[0].mxu0
      %v2140 = vpop.f32.mrb[0].mxu0
      %v2141 = vadd.f32 %v1994, %v2140
      %v2142 = vpop.f32.mrb[0].mxu0
      %2143 = vmatprep.mubr.bf16.mxu0 0
      %2144 = vmatmul.mubr.bf16.gmra.mrb[0].mxu0 %v2021
      %v2145 = vpop.f32.mrb[0].mxu0
      %v2146 = vadd.f32 %v1994, %v2145
      %v2147 = vpop.f32.mrb[0].mxu0
      %v2148 = vpop.f32.mrb[0].mxu0
      %v2149 = vadd.f32 %v1994, %v2148
      %v2150 = vpop.f32.mrb[0].mxu0
      %2151 = vmatprep.mubr.bf16.mxu0 0
      %2152 = vmatmul.mubr.bf16.gmra.mrb[0].mxu0 %v2024
      %v2153 = vpop.f32.mrb[0].mxu0
      %v2154 = vadd.f32 %v1994, %v2153
      %v2155 = vpop.f32.mrb[0].mxu0
      %v2156 = vpop.f32.mrb[0].mxu0
      %v2157 = vadd.f32 %v1994, %v2156
      %v2158 = vpop.f32.mrb[0].mxu0
      %2159 = vmatprep.mubr.bf16.mxu0 0
      %2160 = vmatmul.mubr.bf16.gmra.mrb[0].mxu0 %v2027
      %v2161 = vpop.f32.mrb[0].mxu0
      %v2162 = vadd.f32 %v1994, %v2161
      %v2163 = vpop.f32.mrb[0].mxu0
      %v2164 = vpop.f32.mrb[0].mxu0
      %v2165 = vadd.f32 %v1994, %v2164
      %v2166 = vpop.f32.mrb[0].mxu0
      %2167 = vmatprep.mubr.bf16.mxu0 0
      %2168 = vmatmul.mubr.bf16.gmra.mrb[0].mxu0 %v2030
      %v2169 = vpop.f32.mrb[0].mxu0
      %v2170 = vadd.f32 %v1994, %v2169
      %v2171 = vpop.f32.mrb[0].mxu0
      %v2172 = vpop.f32.mrb[0].mxu0
      %v2173 = vadd.f32 %v1994, %v2172
      %v2174 = vpop.f32.mrb[0].mxu0
      %2175 = vmatprep.mubr.bf16.mxu0 0
      %2176 = vmatmul.mubr.bf16.gmra.mrb[0].mxu0 %v2033
      %v2177 = vpop.f32.mrb[0].mxu0
      %v2178 = vadd.f32 %v1994, %v2177
      %v2179 = vpop.f32.mrb[0].mxu0
      %v2180 = vpop.f32.mrb[0].mxu0
      %v2181 = vadd.f32 %v1994, %v2180
      %v2182 = vpop.f32.mrb[0].mxu0
      %2183 = vmatprep.mubr.bf16.mxu0 0
      %2184 = vmatmul.mubr.bf16.gmra.mrb[0].mxu0 %v2036
      %v2185 = vpop.f32.mrb[0].mxu0
      %v2186 = vadd.f32 %v1994, %v2185
      %v2187 = vpop.f32.mrb[0].mxu0
      %v2188 = vpop.f32.mrb[0].mxu0
      %v2189 = vadd.f32 %v1994, %v2188
      %v2190 = vpop.f32.mrb[0].mxu0
      %2191 = vmatprep.mubr.bf16.mxu0 0
      %2192 = vmatmul.mubr.bf16.gmra.mrb[0].mxu0 %v2039
      %v2193 = vpop.f32.mrb[0].mxu0
      %v2194 = vadd.f32 %v1994, %v2193
      %v2195 = vpop.f32.mrb[0].mxu0
      %v2196 = vpop.f32.mrb[0].mxu0
      %v2197 = vadd.f32 %v1994, %v2196
      %v2198 = vpop.f32.mrb[0].mxu0
      %2199 = vmatprep.mubr.bf16.mxu0 0
      %2200 = vmatmul.mubr.bf16.gmra.mrb[0].mxu0 %v2042
      %v2201 = vpop.f32.mrb[0].mxu0
      %v2202 = vadd.f32 %v1994, %v2201
      %v2203 = vpop.f32.mrb[0].mxu0
      %v2204 = vpop.f32.mrb[0].mxu0
      %v2205 = vadd.f32 %v1994, %v2204
      %v2206 = vpop.f32.mrb[0].mxu0
      %2207 = vdwg.mxu0
      %v2208 = vld [vmem:[%s7] sm:$0x3]
      %v2209 = vld [vmem:[%s8] sm:$0x1]
      %v2211 = vlaneseq
      %v2212 = vshrl.u32 %v2211, 7
      %v2213 = vsub.s32 0, %v2212
      %v2214 = vrot.slane %v2209, %v2213
      %v2217 = vsel %vm503, %v2208, 0
      %2219 = vmatprep.subr.bf16.mxu0 0
      %2220 = vmatpush1.bf16.msra.mxu0 %v2217
      %2221 = vmatprep.subr.bf16.mxu0 0
      %2222 = vmatpush1.bf16.msra.mxu0 0
      %2223 = vmatprep.subr.bf16.mxu0 0
      %2224 = vmatpush1.bf16.msra.mxu0 0
      %2225 = vmatprep.subr.bf16.mxu0 0
      %2226 = vmatpush1.bf16.msra.mxu0 0
      %2227 = vmatprep.subr.bf16.mxu0 0
      %2228 = vmatpush1.bf16.msra.mxu0 0
      %2229 = vmatprep.subr.bf16.mxu0 0
      %2230 = vmatpush1.bf16.msra.mxu0 0
      %2231 = vmatprep.subr.bf16.mxu0 0
      %2232 = vmatpush1.bf16.msra.mxu0 0
      %2233 = vmatprep.subr.bf16.mxu0 0
      %2234 = vmatpush1.bf16.msra.mxu0 0
      %2235 = vmatprep.subr.bf16.mxu0 0
      %2236 = vmatpush1.bf16.msra.mxu0 0
      %2237 = vmatprep.subr.bf16.mxu0 0
      %2238 = vmatpush1.bf16.msra.mxu0 0
      %2239 = vmatprep.subr.bf16.mxu0 0
      %2240 = vmatpush1.bf16.msra.mxu0 0
      %2241 = vmatprep.subr.bf16.mxu0 0
      %2242 = vmatpush1.bf16.msra.mxu0 0
      %2243 = vmatprep.subr.bf16.mxu0 0
      %2244 = vmatpush1.bf16.msra.mxu0 0
      %2245 = vmatprep.subr.bf16.mxu0 0
      %2246 = vmatpush1.bf16.msra.mxu0 0
      %2247 = vmatprep.subr.bf16.mxu0 0
      %2248 = vmatpush1.bf16.msra.mxu0 0
      %2249 = vmatprep.subr.bf16.mxu0 0
      %2250 = vmatpush1.bf16.msra.mxu0 0
      %2251 = vmatprep.mubr.bf16.mxu0 0
      %2252 = vmatmul.mubr.bf16.gmra.mrb[0].mxu0 %v456
      %v2253 = vpop.f32.mrb[0].mxu0
      %v2254 = vadd.f32 %v2214, %v2253
      %v2255 = vpop.f32.mrb[0].mxu0
      %v2256 = vpop.f32.mrb[0].mxu0
      %v2257 = vadd.f32 %v2214, %v2256
      %v2258 = vpop.f32.mrb[0].mxu0
      %2259 = vmatprep.mubr.bf16.mxu0 0
      %2260 = vmatmul.mubr.bf16.gmra.mrb[0].mxu0 %v459
      %v2261 = vpop.f32.mrb[0].mxu0
      %v2262 = vadd.f32 %v2214, %v2261
      %v2263 = vpop.f32.mrb[0].mxu0
      %v2264 = vpop.f32.mrb[0].mxu0
      %v2265 = vadd.f32 %v2214, %v2264
      %v2266 = vpop.f32.mrb[0].mxu0
      %2267 = vmatprep.mubr.bf16.mxu0 0
      %2268 = vmatmul.mubr.bf16.gmra.mrb[0].mxu0 %v462
      %v2269 = vpop.f32.mrb[0].mxu0
      %v2270 = vadd.f32 %v2214, %v2269
      %v2271 = vpop.f32.mrb[0].mxu0
      %v2272 = vpop.f32.mrb[0].mxu0
      %v2273 = vadd.f32 %v2214, %v2272
      %v2274 = vpop.f32.mrb[0].mxu0
      %2275 = vmatprep.mubr.bf16.mxu0 0
      %2276 = vmatmul.mubr.bf16.gmra.mrb[0].mxu0 %v465
      %v2277 = vpop.f32.mrb[0].mxu0
      %v2278 = vadd.f32 %v2214, %v2277
      %v2279 = vpop.f32.mrb[0].mxu0
      %v2280 = vpop.f32.mrb[0].mxu0
      %v2281 = vadd.f32 %v2214, %v2280
      %v2282 = vpop.f32.mrb[0].mxu0
      %2283 = vmatprep.mubr.bf16.mxu0 0
      %2284 = vmatmul.mubr.bf16.gmra.mrb[0].mxu0 %v468
      %v2285 = vpop.f32.mrb[0].mxu0
      %v2286 = vadd.f32 %v2214, %v2285
      %v2287 = vpop.f32.mrb[0].mxu0
      %v2288 = vpop.f32.mrb[0].mxu0
      %v2289 = vadd.f32 %v2214, %v2288
      %v2290 = vpop.f32.mrb[0].mxu0
      %2291 = vmatprep.mubr.bf16.mxu0 0
      %2292 = vmatmul.mubr.bf16.gmra.mrb[0].mxu0 %v471
      %v2293 = vpop.f32.mrb[0].mxu0
      %v2294 = vadd.f32 %v2214, %v2293
      %v2295 = vpop.f32.mrb[0].mxu0
      %v2296 = vpop.f32.mrb[0].mxu0
      %v2297 = vadd.f32 %v2214, %v2296
      %v2298 = vpop.f32.mrb[0].mxu0
      %2299 = vmatprep.mubr.bf16.mxu0 0
      %2300 = vmatmul.mubr.bf16.gmra.mrb[0].mxu0 %v474
      %v2301 = vpop.f32.mrb[0].mxu0
      %v2302 = vadd.f32 %v2214, %v2301
      %v2303 = vpop.f32.mrb[0].mxu0
      %v2304 = vpop.f32.mrb[0].mxu0
      %v2305 = vadd.f32 %v2214, %v2304
      %v2306 = vpop.f32.mrb[0].mxu0
      %2307 = vmatprep.mubr.bf16.mxu0 0
      %2308 = vmatmul.mubr.bf16.gmra.mrb[0].mxu0 %v477
      %v2309 = vpop.f32.mrb[0].mxu0
      %v2310 = vadd.f32 %v2214, %v2309
      %v2311 = vpop.f32.mrb[0].mxu0
      %v2312 = vpop.f32.mrb[0].mxu0
      %v2313 = vadd.f32 %v2214, %v2312
      %v2314 = vpop.f32.mrb[0].mxu0
      %2315 = vmatprep.mubr.bf16.mxu0 0
      %2316 = vmatmul.mubr.bf16.gmra.mrb[0].mxu0 %v480
      %v2317 = vpop.f32.mrb[0].mxu0
      %v2318 = vadd.f32 %v2214, %v2317
      %v2319 = vpop.f32.mrb[0].mxu0
      %v2320 = vpop.f32.mrb[0].mxu0
      %v2321 = vadd.f32 %v2214, %v2320
      %v2322 = vpop.f32.mrb[0].mxu0
      %2323 = vmatprep.mubr.bf16.mxu0 0
      %2324 = vmatmul.mubr.bf16.gmra.mrb[0].mxu0 %v483
      %v2325 = vpop.f32.mrb[0].mxu0
      %v2326 = vadd.f32 %v2214, %v2325
      %v2327 = vpop.f32.mrb[0].mxu0
      %v2328 = vpop.f32.mrb[0].mxu0
      %v2329 = vadd.f32 %v2214, %v2328
      %v2330 = vpop.f32.mrb[0].mxu0
      %2331 = vmatprep.mubr.bf16.mxu0 0
      %2332 = vmatmul.mubr.bf16.gmra.mrb[0].mxu0 %v486
      %v2333 = vpop.f32.mrb[0].mxu0
      %v2334 = vadd.f32 %v2214, %v2333
      %v2335 = vpop.f32.mrb[0].mxu0
      %v2336 = vpop.f32.mrb[0].mxu0
      %v2337 = vadd.f32 %v2214, %v2336
      %v2338 = vpop.f32.mrb[0].mxu0
      %2339 = vmatprep.mubr.bf16.mxu0 0
      %2340 = vmatmul.mubr.bf16.gmra.mrb[0].mxu0 %v489
      %v2341 = vpop.f32.mrb[0].mxu0
      %v2342 = vadd.f32 %v2214, %v2341
      %v2343 = vpop.f32.mrb[0].mxu0
      %v2344 = vpop.f32.mrb[0].mxu0
      %v2345 = vadd.f32 %v2214, %v2344
      %v2346 = vpop.f32.mrb[0].mxu0
      %2347 = vmatprep.mubr.bf16.mxu0 0
      %2348 = vmatmul.mubr.bf16.gmra.mrb[0].mxu0 %v492
      %v2349 = vpop.f32.mrb[0].mxu0
      %v2350 = vadd.f32 %v2214, %v2349
      %v2351 = vpop.f32.mrb[0].mxu0
      %v2352 = vpop.f32.mrb[0].mxu0
      %v2353 = vadd.f32 %v2214, %v2352
      %v2354 = vpop.f32.mrb[0].mxu0
      %2355 = vmatprep.mubr.bf16.mxu0 0
      %2356 = vmatmul.mubr.bf16.gmra.mrb[0].mxu0 %v495
      %v2357 = vpop.f32.mrb[0].mxu0
      %v2358 = vadd.f32 %v2214, %v2357
      %v2359 = vpop.f32.mrb[0].mxu0
      %v2360 = vpop.f32.mrb[0].mxu0
      %v2361 = vadd.f32 %v2214, %v2360
      %v2362 = vpop.f32.mrb[0].mxu0
      %2363 = vmatprep.mubr.bf16.mxu0 0
      %2364 = vmatmul.mubr.bf16.gmra.mrb[0].mxu0 %v498
      %v2365 = vpop.f32.mrb[0].mxu0
      %v2366 = vadd.f32 %v2214, %v2365
      %v2367 = vpop.f32.mrb[0].mxu0
      %v2368 = vpop.f32.mrb[0].mxu0
      %v2369 = vadd.f32 %v2214, %v2368
      %v2370 = vpop.f32.mrb[0].mxu0
      %2371 = vmatprep.mubr.bf16.mxu0 0
      %2372 = vmatmul.mubr.bf16.gmra.mrb[0].mxu0 %v501
      %v2373 = vpop.f32.mrb[0].mxu0
      %v2374 = vadd.f32 %v2214, %v2373
      %v2375 = vpop.f32.mrb[0].mxu0
      %v2376 = vpop.f32.mrb[0].mxu0
      %v2377 = vadd.f32 %v2214, %v2376
      %v2378 = vpop.f32.mrb[0].mxu0
      %2379 = vdwg.mxu0
      %v2380 = vadd.f32 %v2082, %v2254
      %v2381 = vadd.f32 %v2085, %v2257
      %v2382 = vadd.f32 %v2090, %v2262
      %v2383 = vadd.f32 %v2093, %v2265
      %v2384 = vadd.f32 %v2098, %v2270
      %v2385 = vadd.f32 %v2101, %v2273
      %v2386 = vadd.f32 %v2106, %v2278
      %v2387 = vadd.f32 %v2109, %v2281
      %v2388 = vadd.f32 %v2114, %v2286
      %v2389 = vadd.f32 %v2117, %v2289
      %v2390 = vadd.f32 %v2122, %v2294
      %v2391 = vadd.f32 %v2125, %v2297
      %v2392 = vadd.f32 %v2130, %v2302
      %v2393 = vadd.f32 %v2133, %v2305
      %v2394 = vadd.f32 %v2138, %v2310
      %v2395 = vadd.f32 %v2141, %v2313
      %v2396 = vadd.f32 %v2146, %v2318
      %v2397 = vadd.f32 %v2149, %v2321
      %v2398 = vadd.f32 %v2154, %v2326
      %v2399 = vadd.f32 %v2157, %v2329
      %v2400 = vadd.f32 %v2162, %v2334
      %v2401 = vadd.f32 %v2165, %v2337
      %v2402 = vadd.f32 %v2170, %v2342
      %v2403 = vadd.f32 %v2173, %v2345
      %v2404 = vadd.f32 %v2178, %v2350
      %v2405 = vadd.f32 %v2181, %v2353
      %v2406 = vadd.f32 %v2186, %v2358
      %v2407 = vadd.f32 %v2189, %v2361
      %v2408 = vadd.f32 %v2194, %v2366
      %v2409 = vadd.f32 %v2197, %v2369
      %v2410 = vadd.f32 %v2202, %v2374
      %v2411 = vadd.f32 %v2205, %v2377
      %v2412 = vmax.f32 %v2380, 0.0
      %v2413 = vmax.f32 %v2381, 0.0
      %v2414 = vmax.f32 %v2382, 0.0
      %v2415 = vmax.f32 %v2383, 0.0
      %v2416 = vmax.f32 %v2384, 0.0
      %v2417 = vmax.f32 %v2385, 0.0
      %v2418 = vmax.f32 %v2386, 0.0
      %v2419 = vmax.f32 %v2387, 0.0
      %v2420 = vmax.f32 %v2388, 0.0
      %v2421 = vmax.f32 %v2389, 0.0
      %v2422 = vmax.f32 %v2390, 0.0
      %v2423 = vmax.f32 %v2391, 0.0
      %v2424 = vmax.f32 %v2392, 0.0
      %v2425 = vmax.f32 %v2393, 0.0
      %v2426 = vmax.f32 %v2394, 0.0
      %v2427 = vmax.f32 %v2395, 0.0
      %v2428 = vmax.f32 %v2396, 0.0
      %v2429 = vmax.f32 %v2397, 0.0
      %v2430 = vmax.f32 %v2398, 0.0
      %v2431 = vmax.f32 %v2399, 0.0
      %v2432 = vmax.f32 %v2400, 0.0
      %v2433 = vmax.f32 %v2401, 0.0
      %v2434 = vmax.f32 %v2402, 0.0
      %v2435 = vmax.f32 %v2403, 0.0
      %v2436 = vmax.f32 %v2404, 0.0
      %v2437 = vmax.f32 %v2405, 0.0
      %v2438 = vmax.f32 %v2406, 0.0
      %v2439 = vmax.f32 %v2407, 0.0
      %v2440 = vmax.f32 %v2408, 0.0
      %v2441 = vmax.f32 %v2409, 0.0
      %v2442 = vmax.f32 %v2410, 0.0
      %v2443 = vmax.f32 %v2411, 0.0
      %2444 = vst.msk [vmem:[%s332] sm:$0xff] %vm1551, %v2412
      %2445 = vst.msk [vmem:[%s332 + $0x8] sm:$0xff] %vm1551, %v2413
      %2446 = vst.msk [vmem:[%s332 + $0x10] sm:$0xff] %vm1551, %v2414
      %2447 = vst.msk [vmem:[%s332 + $0x18] sm:$0xff] %vm1551, %v2415
      %2448 = vst.msk [vmem:[%s332 + $0x20] sm:$0xff] %vm1551, %v2416
      %2449 = vst.msk [vmem:[%s332 + $0x28] sm:$0xff] %vm1551, %v2417
      %2450 = vst.msk [vmem:[%s332 + $0x30] sm:$0xff] %vm1551, %v2418
      %2451 = vst.msk [vmem:[%s332 + $0x38] sm:$0xff] %vm1551, %v2419
      %2452 = vst.msk [vmem:[%s332 + $0x40] sm:$0xff] %vm1551, %v2420
      %2453 = vst.msk [vmem:[%s332 + $0x48] sm:$0xff] %vm1551, %v2421
      %2454 = vst.msk [vmem:[%s332 + $0x50] sm:$0xff] %vm1551, %v2422
      %2455 = vst.msk [vmem:[%s332 + $0x58] sm:$0xff] %vm1551, %v2423
      %2456 = vst.msk [vmem:[%s332 + $0x60] sm:$0xff] %vm1551, %v2424
      %2457 = vst.msk [vmem:[%s332 + $0x68] sm:$0xff] %vm1551, %v2425
      %2458 = vst.msk [vmem:[%s332 + $0x70] sm:$0xff] %vm1551, %v2426
      %2459 = vst.msk [vmem:[%s332 + $0x78] sm:$0xff] %vm1551, %v2427
      %2460 = vst.msk [vmem:[%s332 + $0x80] sm:$0xff] %vm1551, %v2428
      %2461 = vst.msk [vmem:[%s332 + $0x88] sm:$0xff] %vm1551, %v2429
      %2462 = vst.msk [vmem:[%s332 + $0x90] sm:$0xff] %vm1551, %v2430
      %2463 = vst.msk [vmem:[%s332 + $0x98] sm:$0xff] %vm1551, %v2431
      %2464 = vst.msk [vmem:[%s332 + $0xa0] sm:$0xff] %vm1551, %v2432
      %2465 = vst.msk [vmem:[%s332 + $0xa8] sm:$0xff] %vm1551, %v2433
      %2466 = vst.msk [vmem:[%s332 + $0xb0] sm:$0xff] %vm1551, %v2434
      %2467 = vst.msk [vmem:[%s332 + $0xb8] sm:$0xff] %vm1551, %v2435
      %2468 = vst.msk [vmem:[%s332 + $0xc0] sm:$0xff] %vm1551, %v2436
      %2469 = vst.msk [vmem:[%s332 + $0xc8] sm:$0xff] %vm1551, %v2437
      %2470 = vst.msk [vmem:[%s332 + $0xd0] sm:$0xff] %vm1551, %v2438
      %2471 = vst.msk [vmem:[%s332 + $0xd8] sm:$0xff] %vm1551, %v2439
      %2472 = vst.msk [vmem:[%s332 + $0xe0] sm:$0xff] %vm1551, %v2440
      %2473 = vst.msk [vmem:[%s332 + $0xe8] sm:$0xff] %vm1551, %v2441
      %2474 = vst.msk [vmem:[%s332 + $0xf0] sm:$0xff] %vm1551, %v2442
      %2475 = vst.msk [vmem:[%s332 + $0xf8] sm:$0xff] %vm1551, %v2443
      %p2476 = scmp.lt.s32.totalorder %s20, 1
      %s2477 = scalar_select %p2476, %s20, 1
      %s2478 = smul.addr %s2477, 32
      %s2479 = smul.addr %s2478, 8
      %s2480 = scalar_lea.vmem %s9, %s2479
      // Predicated region
      $region57: #{tpu_custom_call.1} parent=55 // pred_check
        %p2481 = pneg %p232
      $region58: #{tpu_custom_call.1} parent=55 // pred_check_branch
        %2483 = sbr.rel (%p2481) target = $region60
      $region59: #{tpu_custom_call.1} parent=55 // pred_region
        _
      $region60: #{tpu_custom_call.1} parent=55 // pred_fallthru
        _
    $region56: #{tpu_custom_call.1} parent=5 // pred_fallthru
      _
    %p2484 = scmp.le.s32.totalorder 2, %s15
    // Predicated region
    $region61: #{tpu_custom_call.1} parent=5 // pred_check
      %p2485 = pneg %p2484
    $region62: #{tpu_custom_call.1} parent=5 // pred_check_branch
      %2487 = sbr.rel (%p2485) target = $region64
    $region63: #{tpu_custom_call.1} parent=5 // pred_region
      %s2488 = ssub.s32 %s15, 2
      // Predicated region
      $region65: #{tpu_custom_call.1} parent=63 // pred_check
        %p2489 = pneg %p238
      $region66: #{tpu_custom_call.1} parent=63 // pred_check_branch
        %2491 = sbr.rel (%p2489) target = $region68
      $region67: #{tpu_custom_call.1} parent=63 // pred_region
        %p2492 = scmp.lt.s32.totalorder %s21, 1
        %s2493 = scalar_select %p2492, %s21, 1
        %s2494 = smul.addr %s2493, 32
        %s2495 = smul.addr %s2494, 8
        %s2496 = scalar_lea.vmem %s9, %s2495
      $region68: #{tpu_custom_call.1} parent=63 // pred_fallthru
        _
    $region64: #{tpu_custom_call.1} parent=5 // pred_fallthru
      _
  $region6: #{tpu_custom_call.1} parent=0 // loop_footer
    %s19 = sadd.s32 1, %s15
  $region7: #{tpu_custom_call.1} parent=0 // loop_footer_branch
    %14 = sbr.rel target = $region3
  $region8: #{tpu_custom_call.1} parent=0 // loop_exit
    _

</llo_original>
